<compile_context>
chip_gen: v5e
topology: v5e:2x2
jax: 0.10.0
libtpu: 0.0.40
codegen_flags: <defaults>
</compile_context>

<pallas_src>
import jax
import jax.numpy as jnp
from jax.experimental import pallas as pl
from jax.experimental.pallas import tpu as pltpu

IN_DIM = 28 * 28   # 784
HIDDEN = 512       # 500 padded up to a lane-aligned 512
OUT_DIM = 10
OUT_PAD = 128      # 10-wide output padded to one full lane group


def _round_up(n, m):
    return (n + m - 1) // m * m


def mlp_kernel(x_ref, w1_ref, b1_ref, w2_ref, b2_ref, o_ref):
    # x_ref: (tile_b, 784) bf16   w1_ref: (784, 512) bf16   b1_ref: (1, 512) f32
    # w2_ref: (512, 128) bf16     b2_ref: (1, 128) f32      o_ref: (tile_b, 128) f32
    h = jnp.dot(x_ref[...], w1_ref[...], preferred_element_type=jnp.float32)
    h = jnp.maximum(h + b1_ref[...], 0.0)  # ReLU on the VPU
    y = jnp.dot(h.astype(jnp.bfloat16), w2_ref[...],
                preferred_element_type=jnp.float32) + b2_ref[...]
    o_ref[...] = y.astype(o_ref.dtype)


def mlp_forward(x_flat, w1, b1, w2, b2, *, max_tile_b=256):
    B = x_flat.shape[0]
    tile_b = min(max_tile_b, _round_up(B, 8))
    b_pad = _round_up(B, tile_b)
    if b_pad != B:
        x_flat = jnp.pad(x_flat, ((0, b_pad - B), (0, 0)))
    grid = (b_pad // tile_b,)

    cost = pl.CostEstimate(
        flops=2 * b_pad * IN_DIM * HIDDEN + 2 * b_pad * HIDDEN * OUT_PAD,
        transcendentals=0,
        bytes_accessed=(x_flat.size * 2 + w1.size * 2 + w2.size * 2
                        + b1.size * 4 + b2.size * 4 + b_pad * OUT_PAD * 4),
    )

    out = pl.pallas_call(
        mlp_kernel,
        out_shape=jax.ShapeDtypeStruct((b_pad, OUT_PAD), jnp.float32),
        grid=grid,
        in_specs=[
            pl.BlockSpec((tile_b, IN_DIM), lambda i: (i, 0)),    # x batch tile
            pl.BlockSpec((IN_DIM, HIDDEN), lambda i: (0, 0)),    # w1 (VMEM-resident)
            pl.BlockSpec((1, HIDDEN), lambda i: (0, 0)),         # b1
            pl.BlockSpec((HIDDEN, OUT_PAD), lambda i: (0, 0)),   # w2
            pl.BlockSpec((1, OUT_PAD), lambda i: (0, 0)),        # b2
        ],
        out_specs=pl.BlockSpec((tile_b, OUT_PAD), lambda i: (i, 0)),
        compiler_params=pltpu.CompilerParams(
            dimension_semantics=("parallel",),
        ),
        cost_estimate=cost,
    )(x_flat, w1, b1, w2, b2)

    # Slice away batch padding and the lane padding of the 10-wide output.
    return out[:B, :OUT_DIM]


@jax.jit
def model_forward(x_nchw, params):
    # Glue: flatten exactly like x.view(-1, 1*28*28); cast activations to bf16.
    w1, b1, w2, b2 = params
    x_flat = x_nchw.reshape(-1, IN_DIM).astype(jnp.bfloat16)
    return mlp_forward(x_flat, w1, b1, w2, b2)


def init_params(key):
    # Deterministic init mimicking torch.nn.Linear default:
    # uniform(-1/sqrt(fan_in), 1/sqrt(fan_in)). Stored as (in, out), then
    # zero-padded to lane-aligned shapes (exactness preserved: ReLU(0)=0 and
    # padded W2 rows / output columns are zero) and cast to bf16 for the MXU.
    k1, k2, k3, k4 = jax.random.split(key, 4)
    in1, out1 = IN_DIM, 500
    in2, out2 = 500, OUT_DIM
    lim1 = 1.0 / float(jnp.sqrt(jnp.float32(in1)))
    lim2 = 1.0 / float(jnp.sqrt(jnp.float32(in2)))
    w1 = jax.random.uniform(k1, (in1, out1), jnp.float32, -lim1, lim1)
    b1 = jax.random.uniform(k2, (out1,), jnp.float32, -lim1, lim1)
    w2 = jax.random.uniform(k3, (in2, out2), jnp.float32, -lim2, lim2)
    b2 = jax.random.uniform(k4, (out2,), jnp.float32, -lim2, lim2)

    w1p = jnp.zeros((in1, HIDDEN), jnp.bfloat16).at[:, :out1].set(
        w1.astype(jnp.bfloat16))
    b1p = jnp.zeros((1, HIDDEN), jnp.float32).at[0, :out1].set(b1)
    w2p = jnp.zeros((HIDDEN, OUT_PAD), jnp.bfloat16).at[:in2, :out2].set(
        w2.astype(jnp.bfloat16))
    b2p = jnp.zeros((1, OUT_PAD), jnp.float32).at[0, :out2].set(b2)
    return w1p, b1p, w2p, b2p


if __name__ == "__main__":
    key = jax.random.PRNGKey(0)
    pkey, xkey = jax.random.split(key)
    params = init_params(pkey)

    # Small batch, NCHW like the PyTorch module expects (B, 1, 28, 28).
    x = jax.random.normal(xkey, (2, 1, 28, 28), jnp.float32)

    out = model_forward(x, params)
    out = jax.block_until_ready(out)

    # Sanity check against a pure-JAX reference using the same bf16 weights
    # and f32 accumulation.
    w1p, b1p, w2p, b2p = params
    xf = x.reshape(-1, IN_DIM).astype(jnp.bfloat16)
    h = jnp.maximum(
        jnp.dot(xf, w1p, preferred_element_type=jnp.float32) + b1p, 0.0)
    ref = (jnp.dot(h.astype(jnp.bfloat16), w2p,
                   preferred_element_type=jnp.float32) + b2p)[:, :OUT_DIM]

    assert out.shape == (2, OUT_DIM)
    assert jnp.allclose(out, ref, atol=2e-2, rtol=2e-2)

    print("KERNEL_OK")
</pallas_src>

<mosaic_0001>
module attributes {stable_mosaic.version = 11 : i64} {
  func.func @mlp_kernel(%arg0: i32, %arg1: memref<8x784xbf16, #tpu.memory_space<vmem>>, %arg2: memref<784x512xbf16, #tpu.memory_space<vmem>>, %arg3: memref<1x512xf32, #tpu.memory_space<vmem>>, %arg4: memref<512x128xbf16, #tpu.memory_space<vmem>>, %arg5: memref<1x128xf32, #tpu.memory_space<vmem>>, %arg6: memref<8x128xf32, #tpu.memory_space<vmem>>) attributes {dimension_semantics = [#tpu.dimension_semantics<parallel>], iteration_bounds = array<i64: 1>, scalar_prefetch = 0 : i64, scratch_operands = 0 : i64, tpu.core_type = #tpu.core_type<tc>, window_params = [{transform_indices = @transform_0, window_bounds = array<i64: 8, 784>}, {pipeline_mode = #tpu.pipeline_mode<synchronous>, transform_indices = @transform_1, window_bounds = array<i64: 784, 512>}, {pipeline_mode = #tpu.pipeline_mode<synchronous>, transform_indices = @transform_2, window_bounds = array<i64: 1, 512>}, {pipeline_mode = #tpu.pipeline_mode<synchronous>, transform_indices = @transform_3, window_bounds = array<i64: 512, 128>}, {pipeline_mode = #tpu.pipeline_mode<synchronous>, transform_indices = @transform_4, window_bounds = array<i64: 1, 128>}, {transform_indices = @transform_5, window_bounds = array<i64: 8, 128>}]} {
    %c0 = arith.constant 0 : index
    %c0_0 = arith.constant 0 : index
    %0 = vector.load %arg1[%c0, %c0_0] : memref<8x784xbf16, #tpu.memory_space<vmem>>, vector<8x784xbf16>
    %c0_1 = arith.constant 0 : index
    %c0_2 = arith.constant 0 : index
    %1 = vector.load %arg2[%c0_1, %c0_2] : memref<784x512xbf16, #tpu.memory_space<vmem>>, vector<784x512xbf16>
    %cst = arith.constant dense<0.000000e+00> : vector<8x512xf32>
    %2 = tpu.matmul %0, %1, %cst {dimension_numbers = #tpu.dot_dimension_numbers<[1], [0], [0], [1], [0, 0, 1, 1], [], []>} : vector<8x784xbf16>, vector<784x512xbf16>, vector<8x512xf32> -> vector<8x512xf32>
    %c0_3 = arith.constant 0 : index
    %c0_4 = arith.constant 0 : index
    %3 = vector.load %arg3[%c0_3, %c0_4] : memref<1x512xf32, #tpu.memory_space<vmem>>, vector<1x512xf32>
    %4 = vector.broadcast %3 : vector<1x512xf32> to vector<8x512xf32>
    %5 = arith.addf %2, %4 : vector<8x512xf32>
    %cst_5 = arith.constant 0.000000e+00 : f32
    %6 = vector.broadcast %cst_5 : f32 to vector<8x512xf32>
    %7 = arith.maximumf %5, %6 : vector<8x512xf32>
    %8 = arith.truncf %7 : vector<8x512xf32> to vector<8x512xbf16>
    %c0_6 = arith.constant 0 : index
    %c0_7 = arith.constant 0 : index
    %9 = vector.load %arg4[%c0_6, %c0_7] : memref<512x128xbf16, #tpu.memory_space<vmem>>, vector<512x128xbf16>
    %cst_8 = arith.constant dense<0.000000e+00> : vector<8x128xf32>
    %10 = tpu.matmul %8, %9, %cst_8 {dimension_numbers = #tpu.dot_dimension_numbers<[1], [0], [0], [1], [0, 0, 1, 1], [], []>} : vector<8x512xbf16>, vector<512x128xbf16>, vector<8x128xf32> -> vector<8x128xf32>
    %c0_9 = arith.constant 0 : index
    %c0_10 = arith.constant 0 : index
    %11 = vector.load %arg5[%c0_9, %c0_10] : memref<1x128xf32, #tpu.memory_space<vmem>>, vector<1x128xf32>
    %12 = vector.broadcast %11 : vector<1x128xf32> to vector<8x128xf32>
    %13 = arith.addf %10, %12 : vector<8x128xf32>
    %c0_11 = arith.constant 0 : index
    %c0_12 = arith.constant 0 : index
    %14 = vector.load %arg6[%c0_11, %c0_12] : memref<8x128xf32, #tpu.memory_space<vmem>>, vector<8x128xf32>
    tpu.vector_store %arg6[%c0_11, %c0_12], %13 {strides = array<i32>} : memref<8x128xf32, #tpu.memory_space<vmem>>, vector<8x128xf32>,
    return
  }
  func.func @transform_0(%arg0: i32) -> (i32, i32) {
    %c0_i32 = arith.constant 0 : i32
    %c0_i32_0 = arith.constant 0 : i32
    return %arg0, %c0_i32 : i32, i32
  }
  func.func @transform_1(%arg0: i32) -> (i32, i32) {
    %c0_i32 = arith.constant 0 : i32
    %c0_i32_0 = arith.constant 0 : i32
    %c0_i32_1 = arith.constant 0 : i32
    return %c0_i32, %c0_i32_0 : i32, i32
  }
  func.func @transform_2(%arg0: i32) -> (i32, i32) {
    %c0_i32 = arith.constant 0 : i32
    %c0_i32_0 = arith.constant 0 : i32
    %c0_i32_1 = arith.constant 0 : i32
    return %c0_i32, %c0_i32_0 : i32, i32
  }
  func.func @transform_3(%arg0: i32) -> (i32, i32) {
    %c0_i32 = arith.constant 0 : i32
    %c0_i32_0 = arith.constant 0 : i32
    %c0_i32_1 = arith.constant 0 : i32
    return %c0_i32, %c0_i32_0 : i32, i32
  }
  func.func @transform_4(%arg0: i32) -> (i32, i32) {
    %c0_i32 = arith.constant 0 : i32
    %c0_i32_0 = arith.constant 0 : i32
    %c0_i32_1 = arith.constant 0 : i32
    return %c0_i32, %c0_i32_0 : i32, i32
  }
  func.func @transform_5(%arg0: i32) -> (i32, i32) {
    %c0_i32 = arith.constant 0 : i32
    %c0_i32_0 = arith.constant 0 : i32
    return %arg0, %c0_i32 : i32, i32
  }
}

</mosaic_0001>

<llo_original>
// kernel: model_forward.1
$region0: #{model_forward.1}
  #allocation0 [shape = 'u32[]', space=smem, size = 0x4, offset = 0x4, fixed_abs, tag = 'smem constant byte address 0x4 - core index']
  #allocation1 [shape = 'u32[72,128]{1,0:T(1,128)}', space=vmem, size = 0x9000, scoped, tag = 'internal scratch']
  %s0 = inlined_call_operand.vmem [shape: bf16[8,784], index: 0, kind: input, shape index: {}]
  %s1 = inlined_call_operand.hbm [shape: bf16[784,512], index: 1, kind: input, shape index: {}]
  %s2 = inlined_call_operand.vmem [shape: f32[1,512], index: 2, kind: input, shape index: {}]
  %s3 = inlined_call_operand.hbm [shape: bf16[512,128], index: 3, kind: input, shape index: {}]
  %s4 = inlined_call_operand.vmem [shape: f32[1,128], index: 4, kind: input, shape index: {}]
  %s5 = inlined_call_operand.vmem [shape: f32[8,128], index: 5, kind: output, shape index: {}]
  %s6 = sld [smem:[#allocation0]]
  $region38: #{model_forward.1} parent=0
    _
  %s8 = ssub.s32 1, %s6
  %s9 = scalar_select 0, %s8, %s6
  $region1: #{model_forward.1} parent=0
    #allocation2 [shape = 'u8[802816]{0}', space=vmem, size = 0xc4000, scoped, tag = 'input window, operand 1, single buffered']
    #allocation3 [shape = 's32[1]{0}', space=sflag, size = 0x4, scoped, tag = 'scoped memory for model_forward.1']
    #allocation4 [shape = 'u8[131072]{0}', space=vmem, size = 0x20000, scoped, tag = 'input window, operand 3, single buffered']
    #allocation5 [shape = 's32[1]{0}', space=sflag, size = 0x4, scoped, tag = 'scoped memory for model_forward.1']
    %10 = vsyncpa [#allocation3], 0
    %11 = vsyncpa [#allocation5], 0
    // Predicated region
    $region2: #{model_forward.1} parent=1 // pred_check
      _
    $region3: #{model_forward.1} parent=1 // pred_check_branch
      %13 = sbr.rel (0) target = $region5
    $region4: #{model_forward.1} parent=1 // pred_region
      _
    $region5: #{model_forward.1} parent=1 // pred_fallthru
      _
    // Predicated region
    $region6: #{model_forward.1} parent=1 // pred_check
      _
    $region7: #{model_forward.1} parent=1 // pred_check_branch
      %15 = sbr.rel (0) target = $region9
    $region8: #{model_forward.1} parent=1 // pred_region
      %17 = vsyncadd [#allocation3], 0
      %s18 = sshll.u32 %s1, 4
      %s19 = int_to_ptr.hbm [resolvable:$true] %s18
      %s20 = sshll.u32 [#allocation2], 4
      %s21 = int_to_ptr.vmem [resolvable:$true] %s20
      %26 = dma.hbm_to_vmem [thread:$0]  %s19, 25088, %s21, [#allocation3], 256, 256, 16
    $region9: #{model_forward.1} parent=1 // pred_fallthru
      _
    // Predicated region
    $region10: #{model_forward.1} parent=1 // pred_check
      _
    $region11: #{model_forward.1} parent=1 // pred_check_branch
      %28 = sbr.rel (0) target = $region13
    $region12: #{model_forward.1} parent=1 // pred_region
      _
    $region13: #{model_forward.1} parent=1 // pred_fallthru
      _
    // Predicated region
    $region14: #{model_forward.1} parent=1 // pred_check
      _
    $region15: #{model_forward.1} parent=1 // pred_check_branch
      %30 = sbr.rel (0) target = $region17
    $region16: #{model_forward.1} parent=1 // pred_region
      %32 = vsyncadd [#allocation5], 0
      %s33 = sshll.u32 %s3, 4
      %s34 = int_to_ptr.hbm [resolvable:$true] %s33
      %s35 = sshll.u32 [#allocation4], 4
      %s36 = int_to_ptr.vmem [resolvable:$true] %s35
      %41 = dma.hbm_to_vmem [thread:$0]  %s34, 4096, %s36, [#allocation5], 64, 64, 4
    $region17: #{model_forward.1} parent=1 // pred_fallthru
      _
    // Predicated region
    $region18: #{model_forward.1} parent=1 // pred_check
      _
    $region19: #{model_forward.1} parent=1 // pred_check_branch
      %43 = sbr.rel (0) target = $region21
    $region20: #{model_forward.1} parent=1 // pred_region
      _
    $region21: #{model_forward.1} parent=1 // pred_fallthru
      _
    // Predicated region
    $region22: #{model_forward.1} parent=1 // pred_check
      _
    $region23: #{model_forward.1} parent=1 // pred_check_branch
      %45 = sbr.rel (0) target = $region25
    $region24: #{model_forward.1} parent=1 // pred_region
      %47 = dma.done [#allocation3], 25088
    $region25: #{model_forward.1} parent=1 // pred_fallthru
      _
    // Predicated region
    $region26: #{model_forward.1} parent=1 // pred_check
      _
    $region27: #{model_forward.1} parent=1 // pred_check_branch
      %49 = sbr.rel (0) target = $region29
    $region28: #{model_forward.1} parent=1 // pred_region
      %51 = dma.done [#allocation5], 4096
    $region29: #{model_forward.1} parent=1 // pred_fallthru
      _
    %v53 = vld [vmem:[%s0] sm:$0xff]
    %v54 = vld [vmem:[%s0 + $0x8] sm:$0xff]
    %v55 = vld [vmem:[%s0 + $0x10] sm:$0xff]
    %v56 = vld [vmem:[%s0 + $0x18] sm:$0xf]
    %v57 = vld [vmem:[#allocation2] sm:$0xff]
    %v58 = vld [vmem:[#allocation2 + $0x8] sm:$0xff]
    %v59 = vld [vmem:[#allocation2 + $0x10] sm:$0xff]
    %v60 = vld [vmem:[#allocation2 + $0x18] sm:$0xff]
    %v61 = vld [vmem:[#allocation2 + $0x20] sm:$0xff]
    %v62 = vld [vmem:[#allocation2 + $0x28] sm:$0xff]
    %v63 = vld [vmem:[#allocation2 + $0x30] sm:$0xff]
    %v64 = vld [vmem:[#allocation2 + $0x38] sm:$0xff]
    %v65 = vld [vmem:[#allocation2 + $0x40] sm:$0xff]
    %v66 = vld [vmem:[#allocation2 + $0x48] sm:$0xff]
    %v67 = vld [vmem:[#allocation2 + $0x50] sm:$0xff]
    %v68 = vld [vmem:[#allocation2 + $0x58] sm:$0xff]
    %v69 = vld [vmem:[#allocation2 + $0x60] sm:$0xff]
    %v70 = vld [vmem:[#allocation2 + $0x68] sm:$0xff]
    %v71 = vld [vmem:[#allocation2 + $0x70] sm:$0xff]
    %v72 = vld [vmem:[#allocation2 + $0x78] sm:$0xff]
    %v73 = vld [vmem:[#allocation2 + $0x80] sm:$0xff]
    %v74 = vld [vmem:[#allocation2 + $0x88] sm:$0xff]
    %v75 = vld [vmem:[#allocation2 + $0x90] sm:$0xff]
    %v76 = vld [vmem:[#allocation2 + $0x98] sm:$0xff]
    %v77 = vld [vmem:[#allocation2 + $0xa0] sm:$0xff]
    %v78 = vld [vmem:[#allocation2 + $0xa8] sm:$0xff]
    %v79 = vld [vmem:[#allocation2 + $0xb0] sm:$0xff]
    %v80 = vld [vmem:[#allocation2 + $0xb8] sm:$0xff]
    %v81 = vld [vmem:[#allocation2 + $0xc0] sm:$0xff]
    %v82 = vld [vmem:[#allocation2 + $0xc8] sm:$0xff]
    %v83 = vld [vmem:[#allocation2 + $0xd0] sm:$0xff]
    %v84 = vld [vmem:[#allocation2 + $0xd8] sm:$0xff]
    %v85 = vld [vmem:[#allocation2 + $0xe0] sm:$0xff]
    %v86 = vld [vmem:[#allocation2 + $0xe8] sm:$0xff]
    %v87 = vld [vmem:[#allocation2 + $0xf0] sm:$0xff]
    %v88 = vld [vmem:[#allocation2 + $0xf8] sm:$0xff]
    %v89 = vld [vmem:[#allocation2 + $0x100] sm:$0xff]
    %v90 = vld [vmem:[#allocation2 + $0x108] sm:$0xff]
    %v91 = vld [vmem:[#allocation2 + $0x110] sm:$0xff]
    %v92 = vld [vmem:[#allocation2 + $0x118] sm:$0xff]
    %v93 = vld [vmem:[#allocation2 + $0x120] sm:$0xff]
    %v94 = vld [vmem:[#allocation2 + $0x128] sm:$0xff]
    %v95 = vld [vmem:[#allocation2 + $0x130] sm:$0xff]
    %v96 = vld [vmem:[#allocation2 + $0x138] sm:$0xff]
    %v97 = vld [vmem:[#allocation2 + $0x140] sm:$0xff]
    %v98 = vld [vmem:[#allocation2 + $0x148] sm:$0xff]
    %v99 = vld [vmem:[#allocation2 + $0x150] sm:$0xff]
    %v100 = vld [vmem:[#allocation2 + $0x158] sm:$0xff]
    %v101 = vld [vmem:[#allocation2 + $0x160] sm:$0xff]
    %v102 = vld [vmem:[#allocation2 + $0x168] sm:$0xff]
    %v103 = vld [vmem:[#allocation2 + $0x170] sm:$0xff]
    %v104 = vld [vmem:[#allocation2 + $0x178] sm:$0xff]
    %v105 = vld [vmem:[#allocation2 + $0x180] sm:$0xff]
    %v106 = vld [vmem:[#allocation2 + $0x188] sm:$0xff]
    %v107 = vld [vmem:[#allocation2 + $0x190] sm:$0xff]
    %v108 = vld [vmem:[#allocation2 + $0x198] sm:$0xff]
    %v109 = vld [vmem:[#allocation2 + $0x1a0] sm:$0xff]
    %v110 = vld [vmem:[#allocation2 + $0x1a8] sm:$0xff]
    %v111 = vld [vmem:[#allocation2 + $0x1b0] sm:$0xff]
    %v112 = vld [vmem:[#allocation2 + $0x1b8] sm:$0xff]
    %v113 = vld [vmem:[#allocation2 + $0x1c0] sm:$0xff]
    %v114 = vld [vmem:[#allocation2 + $0x1c8] sm:$0xff]
    %v115 = vld [vmem:[#allocation2 + $0x1d0] sm:$0xff]
    %v116 = vld [vmem:[#allocation2 + $0x1d8] sm:$0xff]
    %v117 = vld [vmem:[#allocation2 + $0x1e0] sm:$0xff]
    %v118 = vld [vmem:[#allocation2 + $0x1e8] sm:$0xff]
    %v119 = vld [vmem:[#allocation2 + $0x1f0] sm:$0xff]
    %v120 = vld [vmem:[#allocation2 + $0x1f8] sm:$0xff]
    %v121 = vld [vmem:[#allocation2 + $0x200] sm:$0xff]
    %v122 = vld [vmem:[#allocation2 + $0x208] sm:$0xff]
    %v123 = vld [vmem:[#allocation2 + $0x210] sm:$0xff]
    %v124 = vld [vmem:[#allocation2 + $0x218] sm:$0xff]
    %v125 = vld [vmem:[#allocation2 + $0x220] sm:$0xff]
    %v126 = vld [vmem:[#allocation2 + $0x228] sm:$0xff]
    %v127 = vld [vmem:[#allocation2 + $0x230] sm:$0xff]
    %v128 = vld [vmem:[#allocation2 + $0x238] sm:$0xff]
    %v129 = vld [vmem:[#allocation2 + $0x240] sm:$0xff]
    %v130 = vld [vmem:[#allocation2 + $0x248] sm:$0xff]
    %v131 = vld [vmem:[#allocation2 + $0x250] sm:$0xff]
    %v132 = vld [vmem:[#allocation2 + $0x258] sm:$0xff]
    %v133 = vld [vmem:[#allocation2 + $0x260] sm:$0xff]
    %v134 = vld [vmem:[#allocation2 + $0x268] sm:$0xff]
    %v135 = vld [vmem:[#allocation2 + $0x270] sm:$0xff]
    %v136 = vld [vmem:[#allocation2 + $0x278] sm:$0xff]
    %v137 = vld [vmem:[#allocation2 + $0x280] sm:$0xff]
    %v138 = vld [vmem:[#allocation2 + $0x288] sm:$0xff]
    %v139 = vld [vmem:[#allocation2 + $0x290] sm:$0xff]
    %v140 = vld [vmem:[#allocation2 + $0x298] sm:$0xff]
    %v141 = vld [vmem:[#allocation2 + $0x2a0] sm:$0xff]
    %v142 = vld [vmem:[#allocation2 + $0x2a8] sm:$0xff]
    %v143 = vld [vmem:[#allocation2 + $0x2b0] sm:$0xff]
    %v144 = vld [vmem:[#allocation2 + $0x2b8] sm:$0xff]
    %v145 = vld [vmem:[#allocation2 + $0x2c0] sm:$0xff]
    %v146 = vld [vmem:[#allocation2 + $0x2c8] sm:$0xff]
    %v147 = vld [vmem:[#allocation2 + $0x2d0] sm:$0xff]
    %v148 = vld [vmem:[#allocation2 + $0x2d8] sm:$0xff]
    %v149 = vld [vmem:[#allocation2 + $0x2e0] sm:$0xff]
    %v150 = vld [vmem:[#allocation2 + $0x2e8] sm:$0xff]
    %v151 = vld [vmem:[#allocation2 + $0x2f0] sm:$0xff]
    %v152 = vld [vmem:[#allocation2 + $0x2f8] sm:$0xff]
    %v153 = vld [vmem:[#allocation2 + $0x300] sm:$0xff]
    %v154 = vld [vmem:[#allocation2 + $0x308] sm:$0xff]
    %v155 = vld [vmem:[#allocation2 + $0x310] sm:$0xff]
    %v156 = vld [vmem:[#allocation2 + $0x318] sm:$0xff]
    %v157 = vld [vmem:[#allocation2 + $0x320] sm:$0xff]
    %v158 = vld [vmem:[#allocation2 + $0x328] sm:$0xff]
    %v159 = vld [vmem:[#allocation2 + $0x330] sm:$0xff]
    %v160 = vld [vmem:[#allocation2 + $0x338] sm:$0xff]
    %v161 = vld [vmem:[#allocation2 + $0x340] sm:$0xff]
    %v162 = vld [vmem:[#allocation2 + $0x348] sm:$0xff]
    %v163 = vld [vmem:[#allocation2 + $0x350] sm:$0xff]
    %v164 = vld [vmem:[#allocation2 + $0x358] sm:$0xff]
    %v165 = vld [vmem:[#allocation2 + $0x360] sm:$0xff]
    %v166 = vld [vmem:[#allocation2 + $0x368] sm:$0xff]
    %v167 = vld [vmem:[#allocation2 + $0x370] sm:$0xff]
    %v168 = vld [vmem:[#allocation2 + $0x378] sm:$0xff]
    %v169 = vld [vmem:[#allocation2 + $0x380] sm:$0xff]
    %v170 = vld [vmem:[#allocation2 + $0x388] sm:$0xff]
    %v171 = vld [vmem:[#allocation2 + $0x390] sm:$0xff]
    %v172 = vld [vmem:[#allocation2 + $0x398] sm:$0xff]
    %v173 = vld [vmem:[#allocation2 + $0x3a0] sm:$0xff]
    %v174 = vld [vmem:[#allocation2 + $0x3a8] sm:$0xff]
    %v175 = vld [vmem:[#allocation2 + $0x3b0] sm:$0xff]
    %v176 = vld [vmem:[#allocation2 + $0x3b8] sm:$0xff]
    %v177 = vld [vmem:[#allocation2 + $0x3c0] sm:$0xff]
    %v178 = vld [vmem:[#allocation2 + $0x3c8] sm:$0xff]
    %v179 = vld [vmem:[#allocation2 + $0x3d0] sm:$0xff]
    %v180 = vld [vmem:[#allocation2 + $0x3d8] sm:$0xff]
    %v181 = vld [vmem:[#allocation2 + $0x3e0] sm:$0xff]
    %v182 = vld [vmem:[#allocation2 + $0x3e8] sm:$0xff]
    %v183 = vld [vmem:[#allocation2 + $0x3f0] sm:$0xff]
    %v184 = vld [vmem:[#allocation2 + $0x3f8] sm:$0xff]
    %v185 = vld [vmem:[#allocation2 + $0x400] sm:$0xff]
    %v186 = vld [vmem:[#allocation2 + $0x408] sm:$0xff]
    %v187 = vld [vmem:[#allocation2 + $0x410] sm:$0xff]
    %v188 = vld [vmem:[#allocation2 + $0x418] sm:$0xff]
    %v189 = vld [vmem:[#allocation2 + $0x420] sm:$0xff]
    %v190 = vld [vmem:[#allocation2 + $0x428] sm:$0xff]
    %v191 = vld [vmem:[#allocation2 + $0x430] sm:$0xff]
    %v192 = vld [vmem:[#allocation2 + $0x438] sm:$0xff]
    %v193 = vld [vmem:[#allocation2 + $0x440] sm:$0xff]
    %v194 = vld [vmem:[#allocation2 + $0x448] sm:$0xff]
    %v195 = vld [vmem:[#allocation2 + $0x450] sm:$0xff]
    %v196 = vld [vmem:[#allocation2 + $0x458] sm:$0xff]
    %v197 = vld [vmem:[#allocation2 + $0x460] sm:$0xff]
    %v198 = vld [vmem:[#allocation2 + $0x468] sm:$0xff]
    %v199 = vld [vmem:[#allocation2 + $0x470] sm:$0xff]
    %v200 = vld [vmem:[#allocation2 + $0x478] sm:$0xff]
    %v201 = vld [vmem:[#allocation2 + $0x480] sm:$0xff]
    %v202 = vld [vmem:[#allocation2 + $0x488] sm:$0xff]
    %v203 = vld [vmem:[#allocation2 + $0x490] sm:$0xff]
    %v204 = vld [vmem:[#allocation2 + $0x498] sm:$0xff]
    %v205 = vld [vmem:[#allocation2 + $0x4a0] sm:$0xff]
    %v206 = vld [vmem:[#allocation2 + $0x4a8] sm:$0xff]
    %v207 = vld [vmem:[#allocation2 + $0x4b0] sm:$0xff]
    %v208 = vld [vmem:[#allocation2 + $0x4b8] sm:$0xff]
    %v209 = vld [vmem:[#allocation2 + $0x4c0] sm:$0xff]
    %v210 = vld [vmem:[#allocation2 + $0x4c8] sm:$0xff]
    %v211 = vld [vmem:[#allocation2 + $0x4d0] sm:$0xff]
    %v212 = vld [vmem:[#allocation2 + $0x4d8] sm:$0xff]
    %v213 = vld [vmem:[#allocation2 + $0x4e0] sm:$0xff]
    %v214 = vld [vmem:[#allocation2 + $0x4e8] sm:$0xff]
    %v215 = vld [vmem:[#allocation2 + $0x4f0] sm:$0xff]
    %v216 = vld [vmem:[#allocation2 + $0x4f8] sm:$0xff]
    %v217 = vld [vmem:[#allocation2 + $0x500] sm:$0xff]
    %v218 = vld [vmem:[#allocation2 + $0x508] sm:$0xff]
    %v219 = vld [vmem:[#allocation2 + $0x510] sm:$0xff]
    %v220 = vld [vmem:[#allocation2 + $0x518] sm:$0xff]
    %v221 = vld [vmem:[#allocation2 + $0x520] sm:$0xff]
    %v222 = vld [vmem:[#allocation2 + $0x528] sm:$0xff]
    %v223 = vld [vmem:[#allocation2 + $0x530] sm:$0xff]
    %v224 = vld [vmem:[#allocation2 + $0x538] sm:$0xff]
    %v225 = vld [vmem:[#allocation2 + $0x540] sm:$0xff]
    %v226 = vld [vmem:[#allocation2 + $0x548] sm:$0xff]
    %v227 = vld [vmem:[#allocation2 + $0x550] sm:$0xff]
    %v228 = vld [vmem:[#allocation2 + $0x558] sm:$0xff]
    %v229 = vld [vmem:[#allocation2 + $0x560] sm:$0xff]
    %v230 = vld [vmem:[#allocation2 + $0x568] sm:$0xff]
    %v231 = vld [vmem:[#allocation2 + $0x570] sm:$0xff]
    %v232 = vld [vmem:[#allocation2 + $0x578] sm:$0xff]
    %v233 = vld [vmem:[#allocation2 + $0x580] sm:$0xff]
    %v234 = vld [vmem:[#allocation2 + $0x588] sm:$0xff]
    %v235 = vld [vmem:[#allocation2 + $0x590] sm:$0xff]
    %v236 = vld [vmem:[#allocation2 + $0x598] sm:$0xff]
    %v237 = vld [vmem:[#allocation2 + $0x5a0] sm:$0xff]
    %v238 = vld [vmem:[#allocation2 + $0x5a8] sm:$0xff]
    %v239 = vld [vmem:[#allocation2 + $0x5b0] sm:$0xff]
    %v240 = vld [vmem:[#allocation2 + $0x5b8] sm:$0xff]
    %v241 = vld [vmem:[#allocation2 + $0x5c0] sm:$0xff]
    %v242 = vld [vmem:[#allocation2 + $0x5c8] sm:$0xff]
    %v243 = vld [vmem:[#allocation2 + $0x5d0] sm:$0xff]
    %v244 = vld [vmem:[#allocation2 + $0x5d8] sm:$0xff]
    %v245 = vld [vmem:[#allocation2 + $0x5e0] sm:$0xff]
    %v246 = vld [vmem:[#allocation2 + $0x5e8] sm:$0xff]
    %v247 = vld [vmem:[#allocation2 + $0x5f0] sm:$0xff]
    %v248 = vld [vmem:[#allocation2 + $0x5f8] sm:$0xff]
    %v249 = vld [vmem:[#allocation2 + $0x600] sm:$0xff]
    %v250 = vld [vmem:[#allocation2 + $0x608] sm:$0xff]
    %v251 = vld [vmem:[#allocation2 + $0x610] sm:$0xff]
    %v252 = vld [vmem:[#allocation2 + $0x618] sm:$0xff]
    %v253 = vld [vmem:[%s2] sm:$0xf]
    %v255 = vperm.slane %v253, 0
    %v256 = vperm.slane %v253, 1
    %v257 = vperm.slane %v253, 2
    %v258 = vperm.slane %v253, 3
    %v267 = vunpack.c.l.b16 %v53
    %v268 = vunpack.c.h.b16 %v53
    %v269 = vunpack.c.l.b16 %v54
    %v270 = vunpack.c.h.b16 %v54
    %v271 = vunpack.c.l.b16 %v55
    %v272 = vunpack.c.h.b16 %v55
    %v273 = vunpack.c.l.b16 %v56
    %v274 = vpack.c.b16 %v267, %v267
    %v275 = vpack.c.b16 %v268, %v268
    %v276 = vpack.c.b16 %v269, %v269
    %v277 = vpack.c.b16 %v270, %v270
    %v278 = vpack.c.b16 %v271, %v271
    %v279 = vpack.c.b16 %v272, %v272
    %v280 = vpack.c.b16 %v273, %v273
    %v483 = vunpack.c.l.b16 %v57
    %v484 = vunpack.c.h.b16 %v57
    %v485 = vunpack.c.l.b16 %v58
    %v486 = vunpack.c.h.b16 %v58
    %v487 = vunpack.c.l.b16 %v59
    %v488 = vunpack.c.h.b16 %v59
    %v489 = vunpack.c.l.b16 %v60
    %v490 = vunpack.c.h.b16 %v60
    %v491 = vunpack.c.l.b16 %v61
    %v492 = vunpack.c.h.b16 %v61
    %v493 = vunpack.c.l.b16 %v62
    %v494 = vunpack.c.h.b16 %v62
    %v495 = vunpack.c.l.b16 %v63
    %v496 = vunpack.c.h.b16 %v63
    %v497 = vunpack.c.l.b16 %v64
    %v498 = vunpack.c.h.b16 %v64
    %v499 = vunpack.c.l.b16 %v65
    %v500 = vunpack.c.h.b16 %v65
    %v501 = vunpack.c.l.b16 %v66
    %v502 = vunpack.c.h.b16 %v66
    %v503 = vunpack.c.l.b16 %v67
    %v504 = vunpack.c.h.b16 %v67
    %v505 = vunpack.c.l.b16 %v68
    %v506 = vunpack.c.h.b16 %v68
    %v507 = vunpack.c.l.b16 %v69
    %v508 = vunpack.c.h.b16 %v69
    %v509 = vunpack.c.l.b16 %v70
    %v510 = vunpack.c.h.b16 %v70
    %v511 = vunpack.c.l.b16 %v71
    %v512 = vunpack.c.h.b16 %v71
    %v513 = vunpack.c.l.b16 %v72
    %v514 = vunpack.c.h.b16 %v72
    %v515 = vunpack.c.l.b16 %v73
    %v516 = vunpack.c.h.b16 %v73
    %v517 = vunpack.c.l.b16 %v74
    %v518 = vunpack.c.h.b16 %v74
    %v519 = vunpack.c.l.b16 %v75
    %v520 = vunpack.c.h.b16 %v75
    %v521 = vunpack.c.l.b16 %v76
    %v522 = vunpack.c.h.b16 %v76
    %v523 = vunpack.c.l.b16 %v77
    %v524 = vunpack.c.h.b16 %v77
    %v525 = vunpack.c.l.b16 %v78
    %v526 = vunpack.c.h.b16 %v78
    %v527 = vunpack.c.l.b16 %v79
    %v528 = vunpack.c.h.b16 %v79
    %v529 = vunpack.c.l.b16 %v80
    %v530 = vunpack.c.h.b16 %v80
    %v531 = vunpack.c.l.b16 %v81
    %v532 = vunpack.c.h.b16 %v81
    %v533 = vunpack.c.l.b16 %v82
    %v534 = vunpack.c.h.b16 %v82
    %v535 = vunpack.c.l.b16 %v83
    %v536 = vunpack.c.h.b16 %v83
    %v537 = vunpack.c.l.b16 %v84
    %v538 = vunpack.c.h.b16 %v84
    %v539 = vunpack.c.l.b16 %v85
    %v540 = vunpack.c.h.b16 %v85
    %v541 = vunpack.c.l.b16 %v86
    %v542 = vunpack.c.h.b16 %v86
    %v543 = vunpack.c.l.b16 %v87
    %v544 = vunpack.c.h.b16 %v87
    %v545 = vunpack.c.l.b16 %v88
    %v546 = vunpack.c.h.b16 %v88
    %v547 = vunpack.c.l.b16 %v89
    %v548 = vunpack.c.h.b16 %v89
    %v549 = vunpack.c.l.b16 %v90
    %v550 = vunpack.c.h.b16 %v90
    %v551 = vunpack.c.l.b16 %v91
    %v552 = vunpack.c.h.b16 %v91
    %v553 = vunpack.c.l.b16 %v92
    %v554 = vunpack.c.h.b16 %v92
    %v555 = vunpack.c.l.b16 %v93
    %v556 = vunpack.c.h.b16 %v93
    %v557 = vunpack.c.l.b16 %v94
    %v558 = vunpack.c.h.b16 %v94
    %v559 = vunpack.c.l.b16 %v95
    %v560 = vunpack.c.h.b16 %v95
    %v561 = vunpack.c.l.b16 %v96
    %v562 = vunpack.c.h.b16 %v96
    %v563 = vunpack.c.l.b16 %v97
    %v564 = vunpack.c.h.b16 %v97
    %v565 = vunpack.c.l.b16 %v98
    %v566 = vunpack.c.h.b16 %v98
    %v567 = vunpack.c.l.b16 %v99
    %v568 = vunpack.c.h.b16 %v99
    %v569 = vunpack.c.l.b16 %v100
    %v570 = vunpack.c.h.b16 %v100
    %v571 = vunpack.c.l.b16 %v101
    %v572 = vunpack.c.h.b16 %v101
    %v573 = vunpack.c.l.b16 %v102
    %v574 = vunpack.c.h.b16 %v102
    %v575 = vunpack.c.l.b16 %v103
    %v576 = vunpack.c.h.b16 %v103
    %v577 = vunpack.c.l.b16 %v104
    %v578 = vunpack.c.h.b16 %v104
    %v579 = vunpack.c.l.b16 %v105
    %v580 = vunpack.c.h.b16 %v105
    %v581 = vunpack.c.l.b16 %v106
    %v582 = vunpack.c.h.b16 %v106
    %v583 = vunpack.c.l.b16 %v107
    %v584 = vunpack.c.h.b16 %v107
    %v585 = vunpack.c.l.b16 %v108
    %v586 = vunpack.c.h.b16 %v108
    %v587 = vunpack.c.l.b16 %v109
    %v588 = vunpack.c.h.b16 %v109
    %v589 = vunpack.c.l.b16 %v110
    %v590 = vunpack.c.h.b16 %v110
    %v591 = vunpack.c.l.b16 %v111
    %v592 = vunpack.c.h.b16 %v111
    %v593 = vunpack.c.l.b16 %v112
    %v594 = vunpack.c.h.b16 %v112
    %v595 = vunpack.c.l.b16 %v113
    %v596 = vunpack.c.h.b16 %v113
    %v597 = vunpack.c.l.b16 %v114
    %v598 = vunpack.c.h.b16 %v114
    %v599 = vunpack.c.l.b16 %v115
    %v600 = vunpack.c.h.b16 %v115
    %v601 = vunpack.c.l.b16 %v116
    %v602 = vunpack.c.h.b16 %v116
    %v603 = vunpack.c.l.b16 %v117
    %v604 = vunpack.c.h.b16 %v117
    %v605 = vunpack.c.l.b16 %v118
    %v606 = vunpack.c.h.b16 %v118
    %v607 = vunpack.c.l.b16 %v119
    %v608 = vunpack.c.h.b16 %v119
    %v609 = vunpack.c.l.b16 %v120
    %v610 = vunpack.c.h.b16 %v120
    %v611 = vunpack.c.l.b16 %v121
    %v612 = vunpack.c.h.b16 %v121
    %v613 = vunpack.c.l.b16 %v122
    %v614 = vunpack.c.h.b16 %v122
    %v615 = vunpack.c.l.b16 %v123
    %v616 = vunpack.c.h.b16 %v123
    %v617 = vunpack.c.l.b16 %v124
    %v618 = vunpack.c.h.b16 %v124
    %v619 = vunpack.c.l.b16 %v125
    %v620 = vunpack.c.h.b16 %v125
    %v621 = vunpack.c.l.b16 %v126
    %v622 = vunpack.c.h.b16 %v126
    %v623 = vunpack.c.l.b16 %v127
    %v624 = vunpack.c.h.b16 %v127
    %v625 = vunpack.c.l.b16 %v128
    %v626 = vunpack.c.h.b16 %v128
    %v627 = vunpack.c.l.b16 %v129
    %v628 = vunpack.c.h.b16 %v129
    %v629 = vunpack.c.l.b16 %v130
    %v630 = vunpack.c.h.b16 %v130
    %v631 = vunpack.c.l.b16 %v131
    %v632 = vunpack.c.h.b16 %v131
    %v633 = vunpack.c.l.b16 %v132
    %v634 = vunpack.c.h.b16 %v132
    %v635 = vunpack.c.l.b16 %v133
    %v636 = vunpack.c.h.b16 %v133
    %v637 = vunpack.c.l.b16 %v134
    %v638 = vunpack.c.h.b16 %v134
    %v639 = vunpack.c.l.b16 %v135
    %v640 = vunpack.c.h.b16 %v135
    %v641 = vunpack.c.l.b16 %v136
    %v642 = vunpack.c.h.b16 %v136
    %v643 = vunpack.c.l.b16 %v137
    %v644 = vunpack.c.h.b16 %v137
    %v645 = vunpack.c.l.b16 %v138
    %v646 = vunpack.c.h.b16 %v138
    %v647 = vunpack.c.l.b16 %v139
    %v648 = vunpack.c.h.b16 %v139
    %v649 = vunpack.c.l.b16 %v140
    %v650 = vunpack.c.h.b16 %v140
    %v651 = vunpack.c.l.b16 %v141
    %v652 = vunpack.c.h.b16 %v141
    %v653 = vunpack.c.l.b16 %v142
    %v654 = vunpack.c.h.b16 %v142
    %v655 = vunpack.c.l.b16 %v143
    %v656 = vunpack.c.h.b16 %v143
    %v657 = vunpack.c.l.b16 %v144
    %v658 = vunpack.c.h.b16 %v144
    %v659 = vunpack.c.l.b16 %v145
    %v660 = vunpack.c.h.b16 %v145
    %v661 = vunpack.c.l.b16 %v146
    %v662 = vunpack.c.h.b16 %v146
    %v663 = vunpack.c.l.b16 %v147
    %v664 = vunpack.c.h.b16 %v147
    %v665 = vunpack.c.l.b16 %v148
    %v666 = vunpack.c.h.b16 %v148
    %v667 = vunpack.c.l.b16 %v149
    %v668 = vunpack.c.h.b16 %v149
    %v669 = vunpack.c.l.b16 %v150
    %v670 = vunpack.c.h.b16 %v150
    %v671 = vunpack.c.l.b16 %v151
    %v672 = vunpack.c.h.b16 %v151
    %v673 = vunpack.c.l.b16 %v152
    %v674 = vunpack.c.h.b16 %v152
    %v675 = vunpack.c.l.b16 %v153
    %v676 = vunpack.c.h.b16 %v153
    %v677 = vunpack.c.l.b16 %v154
    %v678 = vunpack.c.h.b16 %v154
    %v679 = vunpack.c.l.b16 %v155
    %v680 = vunpack.c.h.b16 %v155
    %v681 = vunpack.c.l.b16 %v156
    %v682 = vunpack.c.h.b16 %v156
    %v683 = vunpack.c.l.b16 %v157
    %v684 = vunpack.c.h.b16 %v157
    %v685 = vunpack.c.l.b16 %v158
    %v686 = vunpack.c.h.b16 %v158
    %v687 = vunpack.c.l.b16 %v159
    %v688 = vunpack.c.h.b16 %v159
    %v689 = vunpack.c.l.b16 %v160
    %v690 = vunpack.c.h.b16 %v160
    %v691 = vunpack.c.l.b16 %v161
    %v692 = vunpack.c.h.b16 %v161
    %v693 = vunpack.c.l.b16 %v162
    %v694 = vunpack.c.h.b16 %v162
    %v695 = vunpack.c.l.b16 %v163
    %v696 = vunpack.c.h.b16 %v163
    %v697 = vunpack.c.l.b16 %v164
    %v698 = vunpack.c.h.b16 %v164
    %v699 = vunpack.c.l.b16 %v165
    %v700 = vunpack.c.h.b16 %v165
    %v701 = vunpack.c.l.b16 %v166
    %v702 = vunpack.c.h.b16 %v166
    %v703 = vunpack.c.l.b16 %v167
    %v704 = vunpack.c.h.b16 %v167
    %v705 = vunpack.c.l.b16 %v168
    %v706 = vunpack.c.h.b16 %v168
    %v707 = vunpack.c.l.b16 %v169
    %v708 = vunpack.c.h.b16 %v169
    %v709 = vunpack.c.l.b16 %v170
    %v710 = vunpack.c.h.b16 %v170
    %v711 = vunpack.c.l.b16 %v171
    %v712 = vunpack.c.h.b16 %v171
    %v713 = vunpack.c.l.b16 %v172
    %v714 = vunpack.c.h.b16 %v172
    %v715 = vunpack.c.l.b16 %v173
    %v716 = vunpack.c.h.b16 %v173
    %v717 = vunpack.c.l.b16 %v174
    %v718 = vunpack.c.h.b16 %v174
    %v719 = vunpack.c.l.b16 %v175
    %v720 = vunpack.c.h.b16 %v175
    %v721 = vunpack.c.l.b16 %v176
    %v722 = vunpack.c.h.b16 %v176
    %v723 = vunpack.c.l.b16 %v177
    %v724 = vunpack.c.h.b16 %v177
    %v725 = vunpack.c.l.b16 %v178
    %v726 = vunpack.c.h.b16 %v178
    %v727 = vunpack.c.l.b16 %v179
    %v728 = vunpack.c.h.b16 %v179
    %v729 = vunpack.c.l.b16 %v180
    %v730 = vunpack.c.h.b16 %v180
    %v731 = vunpack.c.l.b16 %v181
    %v732 = vunpack.c.h.b16 %v181
    %v733 = vunpack.c.l.b16 %v182
    %v734 = vunpack.c.h.b16 %v182
    %v735 = vunpack.c.l.b16 %v183
    %v736 = vunpack.c.h.b16 %v183
    %v737 = vunpack.c.l.b16 %v184
    %v738 = vunpack.c.h.b16 %v184
    %v739 = vunpack.c.l.b16 %v185
    %v740 = vunpack.c.h.b16 %v185
    %v741 = vunpack.c.l.b16 %v186
    %v742 = vunpack.c.h.b16 %v186
    %v743 = vunpack.c.l.b16 %v187
    %v744 = vunpack.c.h.b16 %v187
    %v745 = vunpack.c.l.b16 %v188
    %v746 = vunpack.c.h.b16 %v188
    %v747 = vunpack.c.l.b16 %v189
    %v748 = vunpack.c.h.b16 %v189
    %v749 = vunpack.c.l.b16 %v190
    %v750 = vunpack.c.h.b16 %v190
    %v751 = vunpack.c.l.b16 %v191
    %v752 = vunpack.c.h.b16 %v191
    %v753 = vunpack.c.l.b16 %v192
    %v754 = vunpack.c.h.b16 %v192
    %v755 = vunpack.c.l.b16 %v193
    %v756 = vunpack.c.h.b16 %v193
    %v757 = vunpack.c.l.b16 %v194
    %v758 = vunpack.c.h.b16 %v194
    %v759 = vunpack.c.l.b16 %v195
    %v760 = vunpack.c.h.b16 %v195
    %v761 = vunpack.c.l.b16 %v196
    %v762 = vunpack.c.h.b16 %v196
    %v763 = vunpack.c.l.b16 %v197
    %v764 = vunpack.c.h.b16 %v197
    %v765 = vunpack.c.l.b16 %v198
    %v766 = vunpack.c.h.b16 %v198
    %v767 = vunpack.c.l.b16 %v199
    %v768 = vunpack.c.h.b16 %v199
    %v769 = vunpack.c.l.b16 %v200
    %v770 = vunpack.c.h.b16 %v200
    %v771 = vunpack.c.l.b16 %v201
    %v772 = vunpack.c.h.b16 %v201
    %v773 = vunpack.c.l.b16 %v202
    %v774 = vunpack.c.h.b16 %v202
    %v775 = vunpack.c.l.b16 %v203
    %v776 = vunpack.c.h.b16 %v203
    %v777 = vunpack.c.l.b16 %v204
    %v778 = vunpack.c.h.b16 %v204
    %v779 = vunpack.c.l.b16 %v205
    %v780 = vunpack.c.h.b16 %v205
    %v781 = vunpack.c.l.b16 %v206
    %v782 = vunpack.c.h.b16 %v206
    %v783 = vunpack.c.l.b16 %v207
    %v784 = vunpack.c.h.b16 %v207
    %v785 = vunpack.c.l.b16 %v208
    %v786 = vunpack.c.h.b16 %v208
    %v787 = vunpack.c.l.b16 %v209
    %v788 = vunpack.c.h.b16 %v209
    %v789 = vunpack.c.l.b16 %v210
    %v790 = vunpack.c.h.b16 %v210
    %v791 = vunpack.c.l.b16 %v211
    %v792 = vunpack.c.h.b16 %v211
    %v793 = vunpack.c.l.b16 %v212
    %v794 = vunpack.c.h.b16 %v212
    %v795 = vunpack.c.l.b16 %v213
    %v796 = vunpack.c.h.b16 %v213
    %v797 = vunpack.c.l.b16 %v214
    %v798 = vunpack.c.h.b16 %v214
    %v799 = vunpack.c.l.b16 %v215
    %v800 = vunpack.c.h.b16 %v215
    %v801 = vunpack.c.l.b16 %v216
    %v802 = vunpack.c.h.b16 %v216
    %v803 = vunpack.c.l.b16 %v217
    %v804 = vunpack.c.h.b16 %v217
    %v805 = vunpack.c.l.b16 %v218
    %v806 = vunpack.c.h.b16 %v218
    %v807 = vunpack.c.l.b16 %v219
    %v808 = vunpack.c.h.b16 %v219
    %v809 = vunpack.c.l.b16 %v220
    %v810 = vunpack.c.h.b16 %v220
    %v811 = vunpack.c.l.b16 %v221
    %v812 = vunpack.c.h.b16 %v221
    %v813 = vunpack.c.l.b16 %v222
    %v814 = vunpack.c.h.b16 %v222
    %v815 = vunpack.c.l.b16 %v223
    %v816 = vunpack.c.h.b16 %v223
    %v817 = vunpack.c.l.b16 %v224
    %v818 = vunpack.c.h.b16 %v224
    %v819 = vunpack.c.l.b16 %v225
    %v820 = vunpack.c.h.b16 %v225
    %v821 = vunpack.c.l.b16 %v226
    %v822 = vunpack.c.h.b16 %v226
    %v823 = vunpack.c.l.b16 %v227
    %v824 = vunpack.c.h.b16 %v227
    %v825 = vunpack.c.l.b16 %v228
    %v826 = vunpack.c.h.b16 %v228
    %v827 = vunpack.c.l.b16 %v229
    %v828 = vunpack.c.h.b16 %v229
    %v829 = vunpack.c.l.b16 %v230
    %v830 = vunpack.c.h.b16 %v230
    %v831 = vunpack.c.l.b16 %v231
    %v832 = vunpack.c.h.b16 %v231
    %v833 = vunpack.c.l.b16 %v232
    %v834 = vunpack.c.h.b16 %v232
    %v835 = vunpack.c.l.b16 %v233
    %v836 = vunpack.c.h.b16 %v233
    %v837 = vunpack.c.l.b16 %v234
    %v838 = vunpack.c.h.b16 %v234
    %v839 = vunpack.c.l.b16 %v235
    %v840 = vunpack.c.h.b16 %v235
    %v841 = vunpack.c.l.b16 %v236
    %v842 = vunpack.c.h.b16 %v236
    %v843 = vunpack.c.l.b16 %v237
    %v844 = vunpack.c.h.b16 %v237
    %v845 = vunpack.c.l.b16 %v238
    %v846 = vunpack.c.h.b16 %v238
    %v847 = vunpack.c.l.b16 %v239
    %v848 = vunpack.c.h.b16 %v239
    %v849 = vunpack.c.l.b16 %v240
    %v850 = vunpack.c.h.b16 %v240
    %v851 = vunpack.c.l.b16 %v241
    %v852 = vunpack.c.h.b16 %v241
    %v853 = vunpack.c.l.b16 %v242
    %v854 = vunpack.c.h.b16 %v242
    %v855 = vunpack.c.l.b16 %v243
    %v856 = vunpack.c.h.b16 %v243
    %v857 = vunpack.c.l.b16 %v244
    %v858 = vunpack.c.h.b16 %v244
    %v859 = vunpack.c.l.b16 %v245
    %v860 = vunpack.c.h.b16 %v245
    %v861 = vunpack.c.l.b16 %v246
    %v862 = vunpack.c.h.b16 %v246
    %v863 = vunpack.c.l.b16 %v247
    %v864 = vunpack.c.h.b16 %v247
    %v865 = vunpack.c.l.b16 %v248
    %v866 = vunpack.c.h.b16 %v248
    %v867 = vunpack.c.l.b16 %v249
    %v868 = vunpack.c.h.b16 %v249
    %v869 = vunpack.c.l.b16 %v250
    %v870 = vunpack.c.h.b16 %v250
    %v871 = vunpack.c.l.b16 %v251
    %v872 = vunpack.c.h.b16 %v251
    %v873 = vunpack.c.l.b16 %v252
    %v874 = vunpack.c.h.b16 %v252
    %v875 = vpack.c.b16 %v487, %v483
    %v876 = vpack.c.b16 %v488, %v484
    %v877 = vpack.c.b16 %v489, %v485
    %v878 = vpack.c.b16 %v490, %v486
    %v879 = vpack.c.b16 %v495, %v491
    %v880 = vpack.c.b16 %v496, %v492
    %v881 = vpack.c.b16 %v497, %v493
    %v882 = vpack.c.b16 %v498, %v494
    %v883 = vpack.c.b16 %v503, %v499
    %v884 = vpack.c.b16 %v504, %v500
    %v885 = vpack.c.b16 %v505, %v501
    %v886 = vpack.c.b16 %v506, %v502
    %v887 = vpack.c.b16 %v511, %v507
    %v888 = vpack.c.b16 %v512, %v508
    %v889 = vpack.c.b16 %v513, %v509
    %v890 = vpack.c.b16 %v514, %v510
    %v891 = vpack.c.b16 %v519, %v515
    %v892 = vpack.c.b16 %v520, %v516
    %v893 = vpack.c.b16 %v521, %v517
    %v894 = vpack.c.b16 %v522, %v518
    %v895 = vpack.c.b16 %v527, %v523
    %v896 = vpack.c.b16 %v528, %v524
    %v897 = vpack.c.b16 %v529, %v525
    %v898 = vpack.c.b16 %v530, %v526
    %v899 = vpack.c.b16 %v535, %v531
    %v900 = vpack.c.b16 %v536, %v532
    %v901 = vpack.c.b16 %v537, %v533
    %v902 = vpack.c.b16 %v538, %v534
    %v903 = vpack.c.b16 %v543, %v539
    %v904 = vpack.c.b16 %v544, %v540
    %v905 = vpack.c.b16 %v545, %v541
    %v906 = vpack.c.b16 %v546, %v542
    %v907 = vpack.c.b16 %v551, %v547
    %v908 = vpack.c.b16 %v552, %v548
    %v909 = vpack.c.b16 %v553, %v549
    %v910 = vpack.c.b16 %v554, %v550
    %v911 = vpack.c.b16 %v559, %v555
    %v912 = vpack.c.b16 %v560, %v556
    %v913 = vpack.c.b16 %v561, %v557
    %v914 = vpack.c.b16 %v562, %v558
    %v915 = vpack.c.b16 %v567, %v563
    %v916 = vpack.c.b16 %v568, %v564
    %v917 = vpack.c.b16 %v569, %v565
    %v918 = vpack.c.b16 %v570, %v566
    %v919 = vpack.c.b16 %v575, %v571
    %v920 = vpack.c.b16 %v576, %v572
    %v921 = vpack.c.b16 %v577, %v573
    %v922 = vpack.c.b16 %v578, %v574
    %v923 = vpack.c.b16 %v583, %v579
    %v924 = vpack.c.b16 %v584, %v580
    %v925 = vpack.c.b16 %v585, %v581
    %v926 = vpack.c.b16 %v586, %v582
    %v927 = vpack.c.b16 %v591, %v587
    %v928 = vpack.c.b16 %v592, %v588
    %v929 = vpack.c.b16 %v593, %v589
    %v930 = vpack.c.b16 %v594, %v590
    %v931 = vpack.c.b16 %v599, %v595
    %v932 = vpack.c.b16 %v600, %v596
    %v933 = vpack.c.b16 %v601, %v597
    %v934 = vpack.c.b16 %v602, %v598
    %v935 = vpack.c.b16 %v607, %v603
    %v936 = vpack.c.b16 %v608, %v604
    %v937 = vpack.c.b16 %v609, %v605
    %v938 = vpack.c.b16 %v610, %v606
    %v939 = vpack.c.b16 %v615, %v611
    %v940 = vpack.c.b16 %v616, %v612
    %v941 = vpack.c.b16 %v617, %v613
    %v942 = vpack.c.b16 %v618, %v614
    %v943 = vpack.c.b16 %v623, %v619
    %v944 = vpack.c.b16 %v624, %v620
    %v945 = vpack.c.b16 %v625, %v621
    %v946 = vpack.c.b16 %v626, %v622
    %v947 = vpack.c.b16 %v631, %v627
    %v948 = vpack.c.b16 %v632, %v628
    %v949 = vpack.c.b16 %v633, %v629
    %v950 = vpack.c.b16 %v634, %v630
    %v951 = vpack.c.b16 %v639, %v635
    %v952 = vpack.c.b16 %v640, %v636
    %v953 = vpack.c.b16 %v641, %v637
    %v954 = vpack.c.b16 %v642, %v638
    %v955 = vpack.c.b16 %v647, %v643
    %v956 = vpack.c.b16 %v648, %v644
    %v957 = vpack.c.b16 %v649, %v645
    %v958 = vpack.c.b16 %v650, %v646
    %v959 = vpack.c.b16 %v655, %v651
    %v960 = vpack.c.b16 %v656, %v652
    %v961 = vpack.c.b16 %v657, %v653
    %v962 = vpack.c.b16 %v658, %v654
    %v963 = vpack.c.b16 %v663, %v659
    %v964 = vpack.c.b16 %v664, %v660
    %v965 = vpack.c.b16 %v665, %v661
    %v966 = vpack.c.b16 %v666, %v662
    %v967 = vpack.c.b16 %v671, %v667
    %v968 = vpack.c.b16 %v672, %v668
    %v969 = vpack.c.b16 %v673, %v669
    %v970 = vpack.c.b16 %v674, %v670
    %v971 = vpack.c.b16 %v679, %v675
    %v972 = vpack.c.b16 %v680, %v676
    %v973 = vpack.c.b16 %v681, %v677
    %v974 = vpack.c.b16 %v682, %v678
    %v975 = vpack.c.b16 %v687, %v683
    %v976 = vpack.c.b16 %v688, %v684
    %v977 = vpack.c.b16 %v689, %v685
    %v978 = vpack.c.b16 %v690, %v686
    %v979 = vpack.c.b16 %v695, %v691
    %v980 = vpack.c.b16 %v696, %v692
    %v981 = vpack.c.b16 %v697, %v693
    %v982 = vpack.c.b16 %v698, %v694
    %v983 = vpack.c.b16 %v703, %v699
    %v984 = vpack.c.b16 %v704, %v700
    %v985 = vpack.c.b16 %v705, %v701
    %v986 = vpack.c.b16 %v706, %v702
    %v987 = vpack.c.b16 %v711, %v707
    %v988 = vpack.c.b16 %v712, %v708
    %v989 = vpack.c.b16 %v713, %v709
    %v990 = vpack.c.b16 %v714, %v710
    %v991 = vpack.c.b16 %v719, %v715
    %v992 = vpack.c.b16 %v720, %v716
    %v993 = vpack.c.b16 %v721, %v717
    %v994 = vpack.c.b16 %v722, %v718
    %v995 = vpack.c.b16 %v727, %v723
    %v996 = vpack.c.b16 %v728, %v724
    %v997 = vpack.c.b16 %v729, %v725
    %v998 = vpack.c.b16 %v730, %v726
    %v999 = vpack.c.b16 %v735, %v731
    %v1000 = vpack.c.b16 %v736, %v732
    %v1001 = vpack.c.b16 %v737, %v733
    %v1002 = vpack.c.b16 %v738, %v734
    %v1003 = vpack.c.b16 %v743, %v739
    %v1004 = vpack.c.b16 %v744, %v740
    %v1005 = vpack.c.b16 %v745, %v741
    %v1006 = vpack.c.b16 %v746, %v742
    %v1007 = vpack.c.b16 %v751, %v747
    %v1008 = vpack.c.b16 %v752, %v748
    %v1009 = vpack.c.b16 %v753, %v749
    %v1010 = vpack.c.b16 %v754, %v750
    %v1011 = vpack.c.b16 %v759, %v755
    %v1012 = vpack.c.b16 %v760, %v756
    %v1013 = vpack.c.b16 %v761, %v757
    %v1014 = vpack.c.b16 %v762, %v758
    %v1015 = vpack.c.b16 %v767, %v763
    %v1016 = vpack.c.b16 %v768, %v764
    %v1017 = vpack.c.b16 %v769, %v765
    %v1018 = vpack.c.b16 %v770, %v766
    %v1019 = vpack.c.b16 %v775, %v771
    %v1020 = vpack.c.b16 %v776, %v772
    %v1021 = vpack.c.b16 %v777, %v773
    %v1022 = vpack.c.b16 %v778, %v774
    %v1023 = vpack.c.b16 %v783, %v779
    %v1024 = vpack.c.b16 %v784, %v780
    %v1025 = vpack.c.b16 %v785, %v781
    %v1026 = vpack.c.b16 %v786, %v782
    %v1027 = vpack.c.b16 %v791, %v787
    %v1028 = vpack.c.b16 %v792, %v788
    %v1029 = vpack.c.b16 %v793, %v789
    %v1030 = vpack.c.b16 %v794, %v790
    %v1031 = vpack.c.b16 %v799, %v795
    %v1032 = vpack.c.b16 %v800, %v796
    %v1033 = vpack.c.b16 %v801, %v797
    %v1034 = vpack.c.b16 %v802, %v798
    %v1035 = vpack.c.b16 %v807, %v803
    %v1036 = vpack.c.b16 %v808, %v804
    %v1037 = vpack.c.b16 %v809, %v805
    %v1038 = vpack.c.b16 %v810, %v806
    %v1039 = vpack.c.b16 %v815, %v811
    %v1040 = vpack.c.b16 %v816, %v812
    %v1041 = vpack.c.b16 %v817, %v813
    %v1042 = vpack.c.b16 %v818, %v814
    %v1043 = vpack.c.b16 %v823, %v819
    %v1044 = vpack.c.b16 %v824, %v820
    %v1045 = vpack.c.b16 %v825, %v821
    %v1046 = vpack.c.b16 %v826, %v822
    %v1047 = vpack.c.b16 %v831, %v827
    %v1048 = vpack.c.b16 %v832, %v828
    %v1049 = vpack.c.b16 %v833, %v829
    %v1050 = vpack.c.b16 %v834, %v830
    %v1051 = vpack.c.b16 %v839, %v835
    %v1052 = vpack.c.b16 %v840, %v836
    %v1053 = vpack.c.b16 %v841, %v837
    %v1054 = vpack.c.b16 %v842, %v838
    %v1055 = vpack.c.b16 %v847, %v843
    %v1056 = vpack.c.b16 %v848, %v844
    %v1057 = vpack.c.b16 %v849, %v845
    %v1058 = vpack.c.b16 %v850, %v846
    %v1059 = vpack.c.b16 %v855, %v851
    %v1060 = vpack.c.b16 %v856, %v852
    %v1061 = vpack.c.b16 %v857, %v853
    %v1062 = vpack.c.b16 %v858, %v854
    %v1063 = vpack.c.b16 %v863, %v859
    %v1064 = vpack.c.b16 %v864, %v860
    %v1065 = vpack.c.b16 %v865, %v861
    %v1066 = vpack.c.b16 %v866, %v862
    %v1067 = vpack.c.b16 %v871, %v867
    %v1068 = vpack.c.b16 %v872, %v868
    %v1069 = vpack.c.b16 %v873, %v869
    %v1070 = vpack.c.b16 %v874, %v870
    %vm1267 = vcmask 130048
    %v1269 = vsel %vm1267, %v280, 0
    %1271 = vmatpush.bf16.msra.mxu0 %v903
    %1272 = vmatpush.bf16.msra.mxu0 %v899
    %1273 = vmatpush.bf16.msra.mxu0 %v895
    %1274 = vmatpush.bf16.msra.mxu0 %v891
    %1275 = vmatpush.bf16.msra.mxu0 %v887
    %1276 = vmatpush.bf16.msra.mxu0 %v883
    %1277 = vmatpush.bf16.msra.mxu0 %v879
    %1278 = vmatpush.bf16.msra.mxu0 %v875
    %1279 = vmatmul.bf16.gmra.mxu0 %v274
    %v1280 = vpop.f32.mrf.mxu0
    %v1281 = vadd.f32 %v255, %v1280
    %v1282 = vpop.f32.mrf.mxu0
    %1283 = vdwg.mxu0
    %1284 = vmatpush.bf16.msra.mxu0 %v935
    %1285 = vmatpush.bf16.msra.mxu0 %v931
    %1286 = vmatpush.bf16.msra.mxu0 %v927
    %1287 = vmatpush.bf16.msra.mxu0 %v923
    %1288 = vmatpush.bf16.msra.mxu0 %v919
    %1289 = vmatpush.bf16.msra.mxu0 %v915
    %1290 = vmatpush.bf16.msra.mxu0 %v911
    %1291 = vmatpush.bf16.msra.mxu0 %v907
    %1292 = vmatmul.bf16.gmra.mxu0 %v275
    %v1293 = vpop.f32.mrf.mxu0
    %v1294 = vadd.f32 %v1281, %v1293
    %v1295 = vpop.f32.mrf.mxu0
    %1296 = vdwg.mxu0
    %1297 = vmatpush.bf16.msra.mxu0 %v967
    %1298 = vmatpush.bf16.msra.mxu0 %v963
    %1299 = vmatpush.bf16.msra.mxu0 %v959
    %1300 = vmatpush.bf16.msra.mxu0 %v955
    %1301 = vmatpush.bf16.msra.mxu0 %v951
    %1302 = vmatpush.bf16.msra.mxu0 %v947
    %1303 = vmatpush.bf16.msra.mxu0 %v943
    %1304 = vmatpush.bf16.msra.mxu0 %v939
    %1305 = vmatmul.bf16.gmra.mxu0 %v276
    %v1306 = vpop.f32.mrf.mxu0
    %v1307 = vadd.f32 %v1294, %v1306
    %v1308 = vpop.f32.mrf.mxu0
    %1309 = vdwg.mxu0
    %1310 = vmatpush.bf16.msra.mxu0 %v999
    %1311 = vmatpush.bf16.msra.mxu0 %v995
    %1312 = vmatpush.bf16.msra.mxu0 %v991
    %1313 = vmatpush.bf16.msra.mxu0 %v987
    %1314 = vmatpush.bf16.msra.mxu0 %v983
    %1315 = vmatpush.bf16.msra.mxu0 %v979
    %1316 = vmatpush.bf16.msra.mxu0 %v975
    %1317 = vmatpush.bf16.msra.mxu0 %v971
    %1318 = vmatmul.bf16.gmra.mxu0 %v277
    %v1319 = vpop.f32.mrf.mxu0
    %v1320 = vadd.f32 %v1307, %v1319
    %v1321 = vpop.f32.mrf.mxu0
    %1322 = vdwg.mxu0
    %1323 = vmatpush.bf16.msra.mxu0 %v1031
    %1324 = vmatpush.bf16.msra.mxu0 %v1027
    %1325 = vmatpush.bf16.msra.mxu0 %v1023
    %1326 = vmatpush.bf16.msra.mxu0 %v1019
    %1327 = vmatpush.bf16.msra.mxu0 %v1015
    %1328 = vmatpush.bf16.msra.mxu0 %v1011
    %1329 = vmatpush.bf16.msra.mxu0 %v1007
    %1330 = vmatpush.bf16.msra.mxu0 %v1003
    %1331 = vmatmul.bf16.gmra.mxu0 %v278
    %v1332 = vpop.f32.mrf.mxu0
    %v1333 = vadd.f32 %v1320, %v1332
    %v1334 = vpop.f32.mrf.mxu0
    %1335 = vdwg.mxu0
    %1336 = vmatpush.bf16.msra.mxu0 %v1063
    %1337 = vmatpush.bf16.msra.mxu0 %v1059
    %1338 = vmatpush.bf16.msra.mxu0 %v1055
    %1339 = vmatpush.bf16.msra.mxu0 %v1051
    %1340 = vmatpush.bf16.msra.mxu0 %v1047
    %1341 = vmatpush.bf16.msra.mxu0 %v1043
    %1342 = vmatpush.bf16.msra.mxu0 %v1039
    %1343 = vmatpush.bf16.msra.mxu0 %v1035
    %1344 = vmatmul.bf16.gmra.mxu0 %v279
    %v1345 = vpop.f32.mrf.mxu0
    %v1346 = vadd.f32 %v1333, %v1345
    %v1347 = vpop.f32.mrf.mxu0
    %1348 = vdwg.mxu0
    %1349 = vmatpush.bf16.msra.mxu0 0
    %1350 = vmatpush.bf16.msra.mxu0 0
    %1351 = vmatpush.bf16.msra.mxu0 0
    %1352 = vmatpush.bf16.msra.mxu0 0
    %1353 = vmatpush.bf16.msra.mxu0 0
    %1354 = vmatpush.bf16.msra.mxu0 0
    %1355 = vmatpush.bf16.msra.mxu0 0
    %1356 = vmatpush.bf16.msra.mxu0 %v1067
    %1357 = vmatmul.bf16.gmra.mxu0 %v1269
    %v1358 = vpop.f32.mrf.mxu0
    %v1359 = vadd.f32 %v1346, %v1358
    %v1360 = vpop.f32.mrf.mxu0
    %1361 = vdwg.mxu0
    %1362 = vmatpush.bf16.msra.mxu0 %v904
    %1363 = vmatpush.bf16.msra.mxu0 %v900
    %1364 = vmatpush.bf16.msra.mxu0 %v896
    %1365 = vmatpush.bf16.msra.mxu0 %v892
    %1366 = vmatpush.bf16.msra.mxu0 %v888
    %1367 = vmatpush.bf16.msra.mxu0 %v884
    %1368 = vmatpush.bf16.msra.mxu0 %v880
    %1369 = vmatpush.bf16.msra.mxu0 %v876
    %1370 = vmatmul.bf16.gmra.mxu0 %v274
    %v1371 = vpop.f32.mrf.mxu0
    %v1372 = vadd.f32 %v256, %v1371
    %v1373 = vpop.f32.mrf.mxu0
    %1374 = vdwg.mxu0
    %1375 = vmatpush.bf16.msra.mxu0 %v936
    %1376 = vmatpush.bf16.msra.mxu0 %v932
    %1377 = vmatpush.bf16.msra.mxu0 %v928
    %1378 = vmatpush.bf16.msra.mxu0 %v924
    %1379 = vmatpush.bf16.msra.mxu0 %v920
    %1380 = vmatpush.bf16.msra.mxu0 %v916
    %1381 = vmatpush.bf16.msra.mxu0 %v912
    %1382 = vmatpush.bf16.msra.mxu0 %v908
    %1383 = vmatmul.bf16.gmra.mxu0 %v275
    %v1384 = vpop.f32.mrf.mxu0
    %v1385 = vadd.f32 %v1372, %v1384
    %v1386 = vpop.f32.mrf.mxu0
    %1387 = vdwg.mxu0
    %1388 = vmatpush.bf16.msra.mxu0 %v968
    %1389 = vmatpush.bf16.msra.mxu0 %v964
    %1390 = vmatpush.bf16.msra.mxu0 %v960
    %1391 = vmatpush.bf16.msra.mxu0 %v956
    %1392 = vmatpush.bf16.msra.mxu0 %v952
    %1393 = vmatpush.bf16.msra.mxu0 %v948
    %1394 = vmatpush.bf16.msra.mxu0 %v944
    %1395 = vmatpush.bf16.msra.mxu0 %v940
    %1396 = vmatmul.bf16.gmra.mxu0 %v276
    %v1397 = vpop.f32.mrf.mxu0
    %v1398 = vadd.f32 %v1385, %v1397
    %v1399 = vpop.f32.mrf.mxu0
    %1400 = vdwg.mxu0
    %1401 = vmatpush.bf16.msra.mxu0 %v1000
    %1402 = vmatpush.bf16.msra.mxu0 %v996
    %1403 = vmatpush.bf16.msra.mxu0 %v992
    %1404 = vmatpush.bf16.msra.mxu0 %v988
    %1405 = vmatpush.bf16.msra.mxu0 %v984
    %1406 = vmatpush.bf16.msra.mxu0 %v980
    %1407 = vmatpush.bf16.msra.mxu0 %v976
    %1408 = vmatpush.bf16.msra.mxu0 %v972
    %1409 = vmatmul.bf16.gmra.mxu0 %v277
    %v1410 = vpop.f32.mrf.mxu0
    %v1411 = vadd.f32 %v1398, %v1410
    %v1412 = vpop.f32.mrf.mxu0
    %1413 = vdwg.mxu0
    %1414 = vmatpush.bf16.msra.mxu0 %v1032
    %1415 = vmatpush.bf16.msra.mxu0 %v1028
    %1416 = vmatpush.bf16.msra.mxu0 %v1024
    %1417 = vmatpush.bf16.msra.mxu0 %v1020
    %1418 = vmatpush.bf16.msra.mxu0 %v1016
    %1419 = vmatpush.bf16.msra.mxu0 %v1012
    %1420 = vmatpush.bf16.msra.mxu0 %v1008
    %1421 = vmatpush.bf16.msra.mxu0 %v1004
    %1422 = vmatmul.bf16.gmra.mxu0 %v278
    %v1423 = vpop.f32.mrf.mxu0
    %v1424 = vadd.f32 %v1411, %v1423
    %v1425 = vpop.f32.mrf.mxu0
    %1426 = vdwg.mxu0
    %1427 = vmatpush.bf16.msra.mxu0 %v1064
    %1428 = vmatpush.bf16.msra.mxu0 %v1060
    %1429 = vmatpush.bf16.msra.mxu0 %v1056
    %1430 = vmatpush.bf16.msra.mxu0 %v1052
    %1431 = vmatpush.bf16.msra.mxu0 %v1048
    %1432 = vmatpush.bf16.msra.mxu0 %v1044
    %1433 = vmatpush.bf16.msra.mxu0 %v1040
    %1434 = vmatpush.bf16.msra.mxu0 %v1036
    %1435 = vmatmul.bf16.gmra.mxu0 %v279
    %v1436 = vpop.f32.mrf.mxu0
    %v1437 = vadd.f32 %v1424, %v1436
    %v1438 = vpop.f32.mrf.mxu0
    %1439 = vdwg.mxu0
    %1440 = vmatpush.bf16.msra.mxu0 0
    %1441 = vmatpush.bf16.msra.mxu0 0
    %1442 = vmatpush.bf16.msra.mxu0 0
    %1443 = vmatpush.bf16.msra.mxu0 0
    %1444 = vmatpush.bf16.msra.mxu0 0
    %1445 = vmatpush.bf16.msra.mxu0 0
    %1446 = vmatpush.bf16.msra.mxu0 0
    %1447 = vmatpush.bf16.msra.mxu0 %v1068
    %1448 = vmatmul.bf16.gmra.mxu0 %v1269
    %v1449 = vpop.f32.mrf.mxu0
    %v1450 = vadd.f32 %v1437, %v1449
    %v1451 = vpop.f32.mrf.mxu0
    %1452 = vdwg.mxu0
    %1453 = vmatpush.bf16.msra.mxu0 %v905
    %1454 = vmatpush.bf16.msra.mxu0 %v901
    %1455 = vmatpush.bf16.msra.mxu0 %v897
    %1456 = vmatpush.bf16.msra.mxu0 %v893
    %1457 = vmatpush.bf16.msra.mxu0 %v889
    %1458 = vmatpush.bf16.msra.mxu0 %v885
    %1459 = vmatpush.bf16.msra.mxu0 %v881
    %1460 = vmatpush.bf16.msra.mxu0 %v877
    %1461 = vmatmul.bf16.gmra.mxu0 %v274
    %v1462 = vpop.f32.mrf.mxu0
    %v1463 = vadd.f32 %v257, %v1462
    %v1464 = vpop.f32.mrf.mxu0
    %1465 = vdwg.mxu0
    %1466 = vmatpush.bf16.msra.mxu0 %v937
    %1467 = vmatpush.bf16.msra.mxu0 %v933
    %1468 = vmatpush.bf16.msra.mxu0 %v929
    %1469 = vmatpush.bf16.msra.mxu0 %v925
    %1470 = vmatpush.bf16.msra.mxu0 %v921
    %1471 = vmatpush.bf16.msra.mxu0 %v917
    %1472 = vmatpush.bf16.msra.mxu0 %v913
    %1473 = vmatpush.bf16.msra.mxu0 %v909
    %1474 = vmatmul.bf16.gmra.mxu0 %v275
    %v1475 = vpop.f32.mrf.mxu0
    %v1476 = vadd.f32 %v1463, %v1475
    %v1477 = vpop.f32.mrf.mxu0
    %1478 = vdwg.mxu0
    %1479 = vmatpush.bf16.msra.mxu0 %v969
    %1480 = vmatpush.bf16.msra.mxu0 %v965
    %1481 = vmatpush.bf16.msra.mxu0 %v961
    %1482 = vmatpush.bf16.msra.mxu0 %v957
    %1483 = vmatpush.bf16.msra.mxu0 %v953
    %1484 = vmatpush.bf16.msra.mxu0 %v949
    %1485 = vmatpush.bf16.msra.mxu0 %v945
    %1486 = vmatpush.bf16.msra.mxu0 %v941
    %1487 = vmatmul.bf16.gmra.mxu0 %v276
    %v1488 = vpop.f32.mrf.mxu0
    %v1489 = vadd.f32 %v1476, %v1488
    %v1490 = vpop.f32.mrf.mxu0
    %1491 = vdwg.mxu0
    %1492 = vmatpush.bf16.msra.mxu0 %v1001
    %1493 = vmatpush.bf16.msra.mxu0 %v997
    %1494 = vmatpush.bf16.msra.mxu0 %v993
    %1495 = vmatpush.bf16.msra.mxu0 %v989
    %1496 = vmatpush.bf16.msra.mxu0 %v985
    %1497 = vmatpush.bf16.msra.mxu0 %v981
    %1498 = vmatpush.bf16.msra.mxu0 %v977
    %1499 = vmatpush.bf16.msra.mxu0 %v973
    %1500 = vmatmul.bf16.gmra.mxu0 %v277
    %v1501 = vpop.f32.mrf.mxu0
    %v1502 = vadd.f32 %v1489, %v1501
    %v1503 = vpop.f32.mrf.mxu0
    %1504 = vdwg.mxu0
    %1505 = vmatpush.bf16.msra.mxu0 %v1033
    %1506 = vmatpush.bf16.msra.mxu0 %v1029
    %1507 = vmatpush.bf16.msra.mxu0 %v1025
    %1508 = vmatpush.bf16.msra.mxu0 %v1021
    %1509 = vmatpush.bf16.msra.mxu0 %v1017
    %1510 = vmatpush.bf16.msra.mxu0 %v1013
    %1511 = vmatpush.bf16.msra.mxu0 %v1009
    %1512 = vmatpush.bf16.msra.mxu0 %v1005
    %1513 = vmatmul.bf16.gmra.mxu0 %v278
    %v1514 = vpop.f32.mrf.mxu0
    %v1515 = vadd.f32 %v1502, %v1514
    %v1516 = vpop.f32.mrf.mxu0
    %1517 = vdwg.mxu0
    %1518 = vmatpush.bf16.msra.mxu0 %v1065
    %1519 = vmatpush.bf16.msra.mxu0 %v1061
    %1520 = vmatpush.bf16.msra.mxu0 %v1057
    %1521 = vmatpush.bf16.msra.mxu0 %v1053
    %1522 = vmatpush.bf16.msra.mxu0 %v1049
    %1523 = vmatpush.bf16.msra.mxu0 %v1045
    %1524 = vmatpush.bf16.msra.mxu0 %v1041
    %1525 = vmatpush.bf16.msra.mxu0 %v1037
    %1526 = vmatmul.bf16.gmra.mxu0 %v279
    %v1527 = vpop.f32.mrf.mxu0
    %v1528 = vadd.f32 %v1515, %v1527
    %v1529 = vpop.f32.mrf.mxu0
    %1530 = vdwg.mxu0
    %1531 = vmatpush.bf16.msra.mxu0 0
    %1532 = vmatpush.bf16.msra.mxu0 0
    %1533 = vmatpush.bf16.msra.mxu0 0
    %1534 = vmatpush.bf16.msra.mxu0 0
    %1535 = vmatpush.bf16.msra.mxu0 0
    %1536 = vmatpush.bf16.msra.mxu0 0
    %1537 = vmatpush.bf16.msra.mxu0 0
    %1538 = vmatpush.bf16.msra.mxu0 %v1069
    %1539 = vmatmul.bf16.gmra.mxu0 %v1269
    %v1540 = vpop.f32.mrf.mxu0
    %v1541 = vadd.f32 %v1528, %v1540
    %v1542 = vpop.f32.mrf.mxu0
    %1543 = vdwg.mxu0
    %1544 = vmatpush.bf16.msra.mxu0 %v906
    %1545 = vmatpush.bf16.msra.mxu0 %v902
    %1546 = vmatpush.bf16.msra.mxu0 %v898
    %1547 = vmatpush.bf16.msra.mxu0 %v894
    %1548 = vmatpush.bf16.msra.mxu0 %v890
    %1549 = vmatpush.bf16.msra.mxu0 %v886
    %1550 = vmatpush.bf16.msra.mxu0 %v882
    %1551 = vmatpush.bf16.msra.mxu0 %v878
    %1552 = vmatmul.bf16.gmra.mxu0 %v274
    %v1553 = vpop.f32.mrf.mxu0
    %v1554 = vadd.f32 %v258, %v1553
    %v1555 = vpop.f32.mrf.mxu0
    %1556 = vdwg.mxu0
    %1557 = vmatpush.bf16.msra.mxu0 %v938
    %1558 = vmatpush.bf16.msra.mxu0 %v934
    %1559 = vmatpush.bf16.msra.mxu0 %v930
    %1560 = vmatpush.bf16.msra.mxu0 %v926
    %1561 = vmatpush.bf16.msra.mxu0 %v922
    %1562 = vmatpush.bf16.msra.mxu0 %v918
    %1563 = vmatpush.bf16.msra.mxu0 %v914
    %1564 = vmatpush.bf16.msra.mxu0 %v910
    %1565 = vmatmul.bf16.gmra.mxu0 %v275
    %v1566 = vpop.f32.mrf.mxu0
    %v1567 = vadd.f32 %v1554, %v1566
    %v1568 = vpop.f32.mrf.mxu0
    %1569 = vdwg.mxu0
    %1570 = vmatpush.bf16.msra.mxu0 %v970
    %1571 = vmatpush.bf16.msra.mxu0 %v966
    %1572 = vmatpush.bf16.msra.mxu0 %v962
    %1573 = vmatpush.bf16.msra.mxu0 %v958
    %1574 = vmatpush.bf16.msra.mxu0 %v954
    %1575 = vmatpush.bf16.msra.mxu0 %v950
    %1576 = vmatpush.bf16.msra.mxu0 %v946
    %1577 = vmatpush.bf16.msra.mxu0 %v942
    %1578 = vmatmul.bf16.gmra.mxu0 %v276
    %v1579 = vpop.f32.mrf.mxu0
    %v1580 = vadd.f32 %v1567, %v1579
    %v1581 = vpop.f32.mrf.mxu0
    %1582 = vdwg.mxu0
    %1583 = vmatpush.bf16.msra.mxu0 %v1002
    %1584 = vmatpush.bf16.msra.mxu0 %v998
    %1585 = vmatpush.bf16.msra.mxu0 %v994
    %1586 = vmatpush.bf16.msra.mxu0 %v990
    %1587 = vmatpush.bf16.msra.mxu0 %v986
    %1588 = vmatpush.bf16.msra.mxu0 %v982
    %1589 = vmatpush.bf16.msra.mxu0 %v978
    %1590 = vmatpush.bf16.msra.mxu0 %v974
    %1591 = vmatmul.bf16.gmra.mxu0 %v277
    %v1592 = vpop.f32.mrf.mxu0
    %v1593 = vadd.f32 %v1580, %v1592
    %v1594 = vpop.f32.mrf.mxu0
    %1595 = vdwg.mxu0
    %1596 = vmatpush.bf16.msra.mxu0 %v1034
    %1597 = vmatpush.bf16.msra.mxu0 %v1030
    %1598 = vmatpush.bf16.msra.mxu0 %v1026
    %1599 = vmatpush.bf16.msra.mxu0 %v1022
    %1600 = vmatpush.bf16.msra.mxu0 %v1018
    %1601 = vmatpush.bf16.msra.mxu0 %v1014
    %1602 = vmatpush.bf16.msra.mxu0 %v1010
    %1603 = vmatpush.bf16.msra.mxu0 %v1006
    %1604 = vmatmul.bf16.gmra.mxu0 %v278
    %v1605 = vpop.f32.mrf.mxu0
    %v1606 = vadd.f32 %v1593, %v1605
    %v1607 = vpop.f32.mrf.mxu0
    %1608 = vdwg.mxu0
    %1609 = vmatpush.bf16.msra.mxu0 %v1066
    %1610 = vmatpush.bf16.msra.mxu0 %v1062
    %1611 = vmatpush.bf16.msra.mxu0 %v1058
    %1612 = vmatpush.bf16.msra.mxu0 %v1054
    %1613 = vmatpush.bf16.msra.mxu0 %v1050
    %1614 = vmatpush.bf16.msra.mxu0 %v1046
    %1615 = vmatpush.bf16.msra.mxu0 %v1042
    %1616 = vmatpush.bf16.msra.mxu0 %v1038
    %1617 = vmatmul.bf16.gmra.mxu0 %v279
    %v1618 = vpop.f32.mrf.mxu0
    %v1619 = vadd.f32 %v1606, %v1618
    %v1620 = vpop.f32.mrf.mxu0
    %1621 = vdwg.mxu0
    %1622 = vmatpush.bf16.msra.mxu0 0
    %1623 = vmatpush.bf16.msra.mxu0 0
    %1624 = vmatpush.bf16.msra.mxu0 0
    %1625 = vmatpush.bf16.msra.mxu0 0
    %1626 = vmatpush.bf16.msra.mxu0 0
    %1627 = vmatpush.bf16.msra.mxu0 0
    %1628 = vmatpush.bf16.msra.mxu0 0
    %1629 = vmatpush.bf16.msra.mxu0 %v1070
    %1630 = vmatmul.bf16.gmra.mxu0 %v1269
    %v1631 = vpop.f32.mrf.mxu0
    %v1632 = vadd.f32 %v1619, %v1631
    %v1633 = vpop.f32.mrf.mxu0
    %1634 = vdwg.mxu0
    %v1635 = vmax.f32 %v1359, 0.0
    %v1636 = vmax.f32 %v1450, 0.0
    %v1637 = vmax.f32 %v1541, 0.0
    %v1638 = vmax.f32 %v1632, 0.0
    %v1639 = vpack.c.bf16 %v1635, %v1635
    %v1640 = vpack.c.bf16 %v1636, %v1636
    %v1641 = vpack.c.bf16 %v1637, %v1637
    %v1642 = vpack.c.bf16 %v1638, %v1638
    %v1643 = vld [vmem:[#allocation4] sm:$0xf]
    %v1644 = vld [vmem:[#allocation4 + $0x4] sm:$0xf]
    %v1645 = vld [vmem:[#allocation4 + $0x8] sm:$0xf]
    %v1646 = vld [vmem:[#allocation4 + $0xc] sm:$0xf]
    %v1647 = vld [vmem:[#allocation4 + $0x10] sm:$0xf]
    %v1648 = vld [vmem:[#allocation4 + $0x14] sm:$0xf]
    %v1649 = vld [vmem:[#allocation4 + $0x18] sm:$0xf]
    %v1650 = vld [vmem:[#allocation4 + $0x1c] sm:$0xf]
    %v1651 = vld [vmem:[#allocation4 + $0x20] sm:$0xf]
    %v1652 = vld [vmem:[#allocation4 + $0x24] sm:$0xf]
    %v1653 = vld [vmem:[#allocation4 + $0x28] sm:$0xf]
    %v1654 = vld [vmem:[#allocation4 + $0x2c] sm:$0xf]
    %v1655 = vld [vmem:[#allocation4 + $0x30] sm:$0xf]
    %v1656 = vld [vmem:[#allocation4 + $0x34] sm:$0xf]
    %v1657 = vld [vmem:[#allocation4 + $0x38] sm:$0xf]
    %v1658 = vld [vmem:[#allocation4 + $0x3c] sm:$0xf]
    %v1659 = vld [vmem:[#allocation4 + $0x40] sm:$0xf]
    %v1660 = vld [vmem:[#allocation4 + $0x44] sm:$0xf]
    %v1661 = vld [vmem:[#allocation4 + $0x48] sm:$0xf]
    %v1662 = vld [vmem:[#allocation4 + $0x4c] sm:$0xf]
    %v1663 = vld [vmem:[#allocation4 + $0x50] sm:$0xf]
    %v1664 = vld [vmem:[#allocation4 + $0x54] sm:$0xf]
    %v1665 = vld [vmem:[#allocation4 + $0x58] sm:$0xf]
    %v1666 = vld [vmem:[#allocation4 + $0x5c] sm:$0xf]
    %v1667 = vld [vmem:[#allocation4 + $0x60] sm:$0xf]
    %v1668 = vld [vmem:[#allocation4 + $0x64] sm:$0xf]
    %v1669 = vld [vmem:[#allocation4 + $0x68] sm:$0xf]
    %v1670 = vld [vmem:[#allocation4 + $0x6c] sm:$0xf]
    %v1671 = vld [vmem:[#allocation4 + $0x70] sm:$0xf]
    %v1672 = vld [vmem:[#allocation4 + $0x74] sm:$0xf]
    %v1673 = vld [vmem:[#allocation4 + $0x78] sm:$0xf]
    %v1674 = vld [vmem:[#allocation4 + $0x7c] sm:$0xf]
    %v1675 = vld [vmem:[#allocation4 + $0x80] sm:$0xf]
    %v1676 = vld [vmem:[#allocation4 + $0x84] sm:$0xf]
    %v1677 = vld [vmem:[#allocation4 + $0x88] sm:$0xf]
    %v1678 = vld [vmem:[#allocation4 + $0x8c] sm:$0xf]
    %v1679 = vld [vmem:[#allocation4 + $0x90] sm:$0xf]
    %v1680 = vld [vmem:[#allocation4 + $0x94] sm:$0xf]
    %v1681 = vld [vmem:[#allocation4 + $0x98] sm:$0xf]
    %v1682 = vld [vmem:[#allocation4 + $0x9c] sm:$0xf]
    %v1683 = vld [vmem:[#allocation4 + $0xa0] sm:$0xf]
    %v1684 = vld [vmem:[#allocation4 + $0xa4] sm:$0xf]
    %v1685 = vld [vmem:[#allocation4 + $0xa8] sm:$0xf]
    %v1686 = vld [vmem:[#allocation4 + $0xac] sm:$0xf]
    %v1687 = vld [vmem:[#allocation4 + $0xb0] sm:$0xf]
    %v1688 = vld [vmem:[#allocation4 + $0xb4] sm:$0xf]
    %v1689 = vld [vmem:[#allocation4 + $0xb8] sm:$0xf]
    %v1690 = vld [vmem:[#allocation4 + $0xbc] sm:$0xf]
    %v1691 = vld [vmem:[#allocation4 + $0xc0] sm:$0xf]
    %v1692 = vld [vmem:[#allocation4 + $0xc4] sm:$0xf]
    %v1693 = vld [vmem:[#allocation4 + $0xc8] sm:$0xf]
    %v1694 = vld [vmem:[#allocation4 + $0xcc] sm:$0xf]
    %v1695 = vld [vmem:[#allocation4 + $0xd0] sm:$0xf]
    %v1696 = vld [vmem:[#allocation4 + $0xd4] sm:$0xf]
    %v1697 = vld [vmem:[#allocation4 + $0xd8] sm:$0xf]
    %v1698 = vld [vmem:[#allocation4 + $0xdc] sm:$0xf]
    %v1699 = vld [vmem:[#allocation4 + $0xe0] sm:$0xf]
    %v1700 = vld [vmem:[#allocation4 + $0xe4] sm:$0xf]
    %v1701 = vld [vmem:[#allocation4 + $0xe8] sm:$0xf]
    %v1702 = vld [vmem:[#allocation4 + $0xec] sm:$0xf]
    %v1703 = vld [vmem:[#allocation4 + $0xf0] sm:$0xf]
    %v1704 = vld [vmem:[#allocation4 + $0xf4] sm:$0xf]
    %v1705 = vld [vmem:[#allocation4 + $0xf8] sm:$0xf]
    %v1706 = vld [vmem:[#allocation4 + $0xfc] sm:$0xf]
    %v1707 = vld [vmem:[%s4] sm:$0x1]
    %v1709 = vperm.slane %v1707, 0
    %v1775 = vunpack.c.l.b16 %v1643
    %v1776 = vunpack.c.l.b16 %v1644
    %v1777 = vunpack.c.l.b16 %v1645
    %v1778 = vunpack.c.l.b16 %v1646
    %v1779 = vunpack.c.l.b16 %v1647
    %v1780 = vunpack.c.l.b16 %v1648
    %v1781 = vunpack.c.l.b16 %v1649
    %v1782 = vunpack.c.l.b16 %v1650
    %v1783 = vunpack.c.l.b16 %v1651
    %v1784 = vunpack.c.l.b16 %v1652
    %v1785 = vunpack.c.l.b16 %v1653
    %v1786 = vunpack.c.l.b16 %v1654
    %v1787 = vunpack.c.l.b16 %v1655
    %v1788 = vunpack.c.l.b16 %v1656
    %v1789 = vunpack.c.l.b16 %v1657
    %v1790 = vunpack.c.l.b16 %v1658
    %v1791 = vunpack.c.l.b16 %v1659
    %v1792 = vunpack.c.l.b16 %v1660
    %v1793 = vunpack.c.l.b16 %v1661
    %v1794 = vunpack.c.l.b16 %v1662
    %v1795 = vunpack.c.l.b16 %v1663
    %v1796 = vunpack.c.l.b16 %v1664
    %v1797 = vunpack.c.l.b16 %v1665
    %v1798 = vunpack.c.l.b16 %v1666
    %v1799 = vunpack.c.l.b16 %v1667
    %v1800 = vunpack.c.l.b16 %v1668
    %v1801 = vunpack.c.l.b16 %v1669
    %v1802 = vunpack.c.l.b16 %v1670
    %v1803 = vunpack.c.l.b16 %v1671
    %v1804 = vunpack.c.l.b16 %v1672
    %v1805 = vunpack.c.l.b16 %v1673
    %v1806 = vunpack.c.l.b16 %v1674
    %v1807 = vunpack.c.l.b16 %v1675
    %v1808 = vunpack.c.l.b16 %v1676
    %v1809 = vunpack.c.l.b16 %v1677
    %v1810 = vunpack.c.l.b16 %v1678
    %v1811 = vunpack.c.l.b16 %v1679
    %v1812 = vunpack.c.l.b16 %v1680
    %v1813 = vunpack.c.l.b16 %v1681
    %v1814 = vunpack.c.l.b16 %v1682
    %v1815 = vunpack.c.l.b16 %v1683
    %v1816 = vunpack.c.l.b16 %v1684
    %v1817 = vunpack.c.l.b16 %v1685
    %v1818 = vunpack.c.l.b16 %v1686
    %v1819 = vunpack.c.l.b16 %v1687
    %v1820 = vunpack.c.l.b16 %v1688
    %v1821 = vunpack.c.l.b16 %v1689
    %v1822 = vunpack.c.l.b16 %v1690
    %v1823 = vunpack.c.l.b16 %v1691
    %v1824 = vunpack.c.l.b16 %v1692
    %v1825 = vunpack.c.l.b16 %v1693
    %v1826 = vunpack.c.l.b16 %v1694
    %v1827 = vunpack.c.l.b16 %v1695
    %v1828 = vunpack.c.l.b16 %v1696
    %v1829 = vunpack.c.l.b16 %v1697
    %v1830 = vunpack.c.l.b16 %v1698
    %v1831 = vunpack.c.l.b16 %v1699
    %v1832 = vunpack.c.l.b16 %v1700
    %v1833 = vunpack.c.l.b16 %v1701
    %v1834 = vunpack.c.l.b16 %v1702
    %v1835 = vunpack.c.l.b16 %v1703
    %v1836 = vunpack.c.l.b16 %v1704
    %v1837 = vunpack.c.l.b16 %v1705
    %v1838 = vunpack.c.l.b16 %v1706
    %v1839 = vpack.c.b16 %v1776, %v1775
    %v1840 = vpack.c.b16 %v1778, %v1777
    %v1841 = vpack.c.b16 %v1780, %v1779
    %v1842 = vpack.c.b16 %v1782, %v1781
    %v1843 = vpack.c.b16 %v1784, %v1783
    %v1844 = vpack.c.b16 %v1786, %v1785
    %v1845 = vpack.c.b16 %v1788, %v1787
    %v1846 = vpack.c.b16 %v1790, %v1789
    %v1847 = vpack.c.b16 %v1792, %v1791
    %v1848 = vpack.c.b16 %v1794, %v1793
    %v1849 = vpack.c.b16 %v1796, %v1795
    %v1850 = vpack.c.b16 %v1798, %v1797
    %v1851 = vpack.c.b16 %v1800, %v1799
    %v1852 = vpack.c.b16 %v1802, %v1801
    %v1853 = vpack.c.b16 %v1804, %v1803
    %v1854 = vpack.c.b16 %v1806, %v1805
    %v1855 = vpack.c.b16 %v1808, %v1807
    %v1856 = vpack.c.b16 %v1810, %v1809
    %v1857 = vpack.c.b16 %v1812, %v1811
    %v1858 = vpack.c.b16 %v1814, %v1813
    %v1859 = vpack.c.b16 %v1816, %v1815
    %v1860 = vpack.c.b16 %v1818, %v1817
    %v1861 = vpack.c.b16 %v1820, %v1819
    %v1862 = vpack.c.b16 %v1822, %v1821
    %v1863 = vpack.c.b16 %v1824, %v1823
    %v1864 = vpack.c.b16 %v1826, %v1825
    %v1865 = vpack.c.b16 %v1828, %v1827
    %v1866 = vpack.c.b16 %v1830, %v1829
    %v1867 = vpack.c.b16 %v1832, %v1831
    %v1868 = vpack.c.b16 %v1834, %v1833
    %v1869 = vpack.c.b16 %v1836, %v1835
    %v1870 = vpack.c.b16 %v1838, %v1837
    %1903 = vmatpush.bf16.msra.mxu0 %v1846
    %1904 = vmatpush.bf16.msra.mxu0 %v1845
    %1905 = vmatpush.bf16.msra.mxu0 %v1844
    %1906 = vmatpush.bf16.msra.mxu0 %v1843
    %1907 = vmatpush.bf16.msra.mxu0 %v1842
    %1908 = vmatpush.bf16.msra.mxu0 %v1841
    %1909 = vmatpush.bf16.msra.mxu0 %v1840
    %1910 = vmatpush.bf16.msra.mxu0 %v1839
    %1911 = vmatmul.bf16.gmra.mxu0 %v1639
    %v1912 = vpop.f32.mrf.mxu0
    %v1913 = vadd.f32 %v1709, %v1912
    %v1914 = vpop.f32.mrf.mxu0
    %1915 = vdwg.mxu0
    %1916 = vmatpush.bf16.msra.mxu0 %v1854
    %1917 = vmatpush.bf16.msra.mxu0 %v1853
    %1918 = vmatpush.bf16.msra.mxu0 %v1852
    %1919 = vmatpush.bf16.msra.mxu0 %v1851
    %1920 = vmatpush.bf16.msra.mxu0 %v1850
    %1921 = vmatpush.bf16.msra.mxu0 %v1849
    %1922 = vmatpush.bf16.msra.mxu0 %v1848
    %1923 = vmatpush.bf16.msra.mxu0 %v1847
    %1924 = vmatmul.bf16.gmra.mxu0 %v1640
    %v1925 = vpop.f32.mrf.mxu0
    %v1926 = vadd.f32 %v1913, %v1925
    %v1927 = vpop.f32.mrf.mxu0
    %1928 = vdwg.mxu0
    %1929 = vmatpush.bf16.msra.mxu0 %v1862
    %1930 = vmatpush.bf16.msra.mxu0 %v1861
    %1931 = vmatpush.bf16.msra.mxu0 %v1860
    %1932 = vmatpush.bf16.msra.mxu0 %v1859
    %1933 = vmatpush.bf16.msra.mxu0 %v1858
    %1934 = vmatpush.bf16.msra.mxu0 %v1857
    %1935 = vmatpush.bf16.msra.mxu0 %v1856
    %1936 = vmatpush.bf16.msra.mxu0 %v1855
    %1937 = vmatmul.bf16.gmra.mxu0 %v1641
    %v1938 = vpop.f32.mrf.mxu0
    %v1939 = vadd.f32 %v1926, %v1938
    %v1940 = vpop.f32.mrf.mxu0
    %1941 = vdwg.mxu0
    %1942 = vmatpush.bf16.msra.mxu0 %v1870
    %1943 = vmatpush.bf16.msra.mxu0 %v1869
    %1944 = vmatpush.bf16.msra.mxu0 %v1868
    %1945 = vmatpush.bf16.msra.mxu0 %v1867
    %1946 = vmatpush.bf16.msra.mxu0 %v1866
    %1947 = vmatpush.bf16.msra.mxu0 %v1865
    %1948 = vmatpush.bf16.msra.mxu0 %v1864
    %1949 = vmatpush.bf16.msra.mxu0 %v1863
    %1950 = vmatmul.bf16.gmra.mxu0 %v1642
    %v1951 = vpop.f32.mrf.mxu0
    %v1952 = vadd.f32 %v1939, %v1951
    %v1953 = vpop.f32.mrf.mxu0
    %1954 = vdwg.mxu0
    %1955 = vst [vmem:[%s5] sm:$0xff] %v1952
    // Predicated region
    $region30: #{model_forward.1} parent=1 // pred_check
      _
    $region31: #{model_forward.1} parent=1 // pred_check_branch
      %1957 = sbr.rel (0) target = $region33
    $region32: #{model_forward.1} parent=1 // pred_region
      _
    $region33: #{model_forward.1} parent=1 // pred_fallthru
      _
    // Predicated region
    $region34: #{model_forward.1} parent=1 // pred_check
      _
    $region35: #{model_forward.1} parent=1 // pred_check_branch
      %1959 = sbr.rel (0) target = $region37
    $region36: #{model_forward.1} parent=1 // pred_region
      _
    $region37: #{model_forward.1} parent=1 // pred_fallthru
      _
    %1960 = vsyncpa [#allocation3], 1
    %1961 = vsyncpa [#allocation5], 1

</llo_original>
